<compile_context>
chip_gen: v5e
topology: v5e:2x2
jax: 0.10.0
libtpu: 0.0.40
codegen_flags: <defaults>
</compile_context>

<pallas_src>
from functools import partial

import jax
import jax.numpy as jnp
import numpy as np
from jax.experimental import pallas as pl
from jax.experimental.pallas import tpu as pltpu


# ----------------------------------------------------------------------------
# Tiling helper
# ----------------------------------------------------------------------------
def _pick_tile(n, target, quantum):
    """Tile size for an axis of length `n`.

    - n <= target: use the full dim (always a legal BlockSpec).
    - otherwise prefer the largest multiple of `quantum` <= target that divides
      n (no padded edge tiles); if none exists, use `target` itself and let the
      cdiv grid + Pallas edge-tile masking handle the remainder.
    VMEM use is therefore bounded by `target` regardless of slen.
    """
    if n <= target:
        return n
    best = None
    for cand in range(quantum, target + 1, quantum):
        if n % cand == 0:
            best = cand
    return best if best is not None else target


# ----------------------------------------------------------------------------
# Pallas kernels
# ----------------------------------------------------------------------------
def _sincos_kernel(angle_ref, sin_ref, cos_ref):
    # angle_ref: (1, D2); sin/cos block: (tq, D2) -- emitted directly in the
    # (HW, D2) layout the module returns, so no XLA transpose afterwards.
    tq, d2 = sin_ref.shape
    base = pl.program_id(0) * tq
    idx = (jax.lax.broadcasted_iota(jnp.int32, (tq, d2), 0) + base).astype(jnp.float32)
    theta = idx * angle_ref[...]                       # (1, D2) broadcast over sublanes
    sin_ref[...] = jnp.sin(theta)
    cos_ref[...] = jnp.cos(theta)


def _mask1_tile(qi, ki, tq, tk, w):
    # Manhattan-distance tile built from 1-D iotas: only O(tq+tk) int div/mod,
    # then a broadcasted |ri-rj| + |ci-cj| over the (tq, tk) tile.
    ii = jax.lax.broadcasted_iota(jnp.int32, (tq, 1), 0) + qi * tq   # global row idx
    jj = jax.lax.broadcasted_iota(jnp.int32, (1, tk), 1) + ki * tk   # global col idx
    ri, ci = ii // w, ii % w
    rj, cj = jj // w, jj % w
    return (jnp.abs(ri - rj) + jnp.abs(ci - cj)).astype(jnp.float32)


def _mask1_kernel(o_ref, *, w):
    tq, tk = o_ref.shape
    o_ref[...] = _mask1_tile(pl.program_id(0), pl.program_id(1), tq, tk, w)


def _fused_mask_kernel(decay_ref, dcol_ref, drow_ref, maskd_ref, masksum_ref, *, w, nh):
    # decay_ref  : SMEM (NH,)
    # dcol_ref   : (1, tq, 1)  depth values of the row-tile (column layout)
    # drow_ref   : (1, 1, tk)  depth values of the col-tile (row layout)
    # maskd_ref  : (1, 1, tq, tk)      masksum_ref: (1, NH, tq, tk)
    tq, tk = masksum_ref.shape[2], masksum_ref.shape[3]
    qi, ki = pl.program_id(1), pl.program_id(2)
    mask1 = _mask1_tile(qi, ki, tq, tk, w)
    mask_d = jnp.abs(dcol_ref[0] - drow_ref[0])                       # (tq, tk) f32
    maskd_ref[0, 0] = mask_d.astype(maskd_ref.dtype)
    base = 0.85 * mask1 + 0.15 * mask_d                               # computed ONCE per tile
    for hh in range(nh):                                              # trace-time unrolled
        masksum_ref[0, hh] = (base * decay_ref[hh]).astype(masksum_ref.dtype)


# ----------------------------------------------------------------------------
# Plain-JAX glue: bilinear resize (F.interpolate, align_corners=False)
# ----------------------------------------------------------------------------
def bilinear_resize_nchw(x, out_h, out_w):
    B, C, Hin, Win = x.shape
    x = x.astype(jnp.float32)
    ys = (jnp.arange(out_h, dtype=jnp.float32) + 0.5) * (Hin / out_h) - 0.5
    xs = (jnp.arange(out_w, dtype=jnp.float32) + 0.5) * (Win / out_w) - 0.5
    ys = jnp.maximum(ys, 0.0)
    xs = jnp.maximum(xs, 0.0)
    y0 = jnp.floor(ys).astype(jnp.int32)
    x0 = jnp.floor(xs).astype(jnp.int32)
    y1 = jnp.minimum(y0 + 1, Hin - 1)
    x1 = jnp.minimum(x0 + 1, Win - 1)
    wy = (ys - y0.astype(jnp.float32))[None, None, :, None]
    wx = (xs - x0.astype(jnp.float32))[None, None, None, :]

    def g(yi, xi):
        return x[:, :, yi, :][:, :, :, xi]

    top = g(y0, x0) * (1.0 - wx) + g(y0, x1) * wx
    bot = g(y1, x0) * (1.0 - wx) + g(y1, x1) * wx
    return top * (1.0 - wy) + bot * wy


# ----------------------------------------------------------------------------
# Module wrapper
# ----------------------------------------------------------------------------
class GeoPriorPallas:
    # Per-output tile targets (sublane x lane).  With NH folded into the block,
    # the fused mask_sum block is NH*tq*tk*4 bytes; targets are shrunk below so
    # the double-buffered block stays well under the explicit 32 MiB VMEM limit.
    TQ_TARGET = 512
    TK_TARGET = 512
    VMEM_LIMIT_BYTES = 32 * 1024 * 1024
    FUSED_BLOCK_BUDGET = 8 * 1024 * 1024   # bytes for ONE mask_sum output block

    def __init__(self, embed_dim=128, num_heads=4, initial_value=2, heads_range=6,
                 mask_dtype=jnp.float32):
        half = embed_dim // num_heads // 2
        angle = 1.0 / (10000.0 ** jnp.linspace(0.0, 1.0, half))
        angle = jnp.repeat(angle, 2)                                   # (embed_dim//num_heads,)
        decay = jnp.log(
            1.0 - 2.0 ** (-initial_value
                          - heads_range * jnp.arange(num_heads, dtype=jnp.float32) / num_heads))
        self.angle = angle.astype(jnp.float32)
        self.decay = decay.astype(jnp.float32)
        self.num_heads = num_heads
        # Set to jnp.bfloat16 to halve mask_d / mask_sum store traffic (the
        # kernel accumulates in f32 and casts on store).  Default f32 keeps the
        # exact PyTorch forward semantics.
        self.mask_dtype = mask_dtype

    def _tile_sizes(self, HW):
        NH = self.num_heads
        itemsize = jnp.dtype(self.mask_dtype).itemsize
        tq_target, tk_target = self.TQ_TARGET, self.TK_TARGET
        # Keep the fused (1, NH, tq, tk) block under the budget (double-buffered
        # this is <= 2 * budget, plus the ~1/NH-sized mask_d block + tiny inputs).
        while NH * tq_target * tk_target * itemsize > self.FUSED_BLOCK_BUDGET and tk_target > 128:
            tk_target //= 2
        while NH * tq_target * tk_target * itemsize > self.FUSED_BLOCK_BUDGET and tq_target > 8:
            tq_target //= 2
        tq = _pick_tile(HW, tq_target, 8)      # sublane tile
        tk = _pick_tile(HW, tk_target, 128)    # lane tile
        return tq, tk

    def __call__(self, slen, depth_map):
        h, w = slen
        HW = h * w
        B = depth_map.shape[0]
        NH = self.num_heads
        D2 = self.angle.shape[0]

        depth = bilinear_resize_nchw(depth_map, h, w).astype(jnp.float32)  # (B, 1, h, w)
        depth_row = depth.reshape(B, 1, HW)      # free metadata reshape
        depth_col = depth.reshape(B, HW, 1)      # free metadata reshape
        # TODO(synk): depth_col's (1, tq, 1) block is lane-width-1; acceptable
        # while the fused kernel is store-bound (revisit only if VALU-bound).

        tq, tk = self._tile_sizes(HW)
        nq, nk = pl.cdiv(HW, tq), pl.cdiv(HW, tk)

        # --- sin / cos tables: emitted directly as (HW, D2), tiled over HW ----
        tqs = _pick_tile(HW, self.TQ_TARGET, 8)
        nqs = pl.cdiv(HW, tqs)
        sin2d, cos2d = pl.pallas_call(
            _sincos_kernel,
            out_shape=(jax.ShapeDtypeStruct((HW, D2), jnp.float32),
                       jax.ShapeDtypeStruct((HW, D2), jnp.float32)),
            grid=(nqs,),
            in_specs=[pl.BlockSpec((1, D2), lambda i: (0, 0))],
            out_specs=(pl.BlockSpec((tqs, D2), lambda i: (i, 0)),
                       pl.BlockSpec((tqs, D2), lambda i: (i, 0))),
            compiler_params=pltpu.CompilerParams(dimension_semantics=("parallel",)),
        )(self.angle.reshape(1, D2))
        sin = sin2d.reshape(h, w, D2)
        cos = cos2d.reshape(h, w, D2)

        # --- mask_1: batch-invariant positional decay (written exactly once) --
        mask_1 = pl.pallas_call(
            partial(_mask1_kernel, w=w),
            out_shape=jax.ShapeDtypeStruct((HW, HW), jnp.float32),
            grid=(nq, nk),
            out_specs=pl.BlockSpec((tq, tk), lambda qi, ki: (qi, ki)),
            compiler_params=pltpu.CompilerParams(
                dimension_semantics=("parallel", "parallel"),
                vmem_limit_bytes=self.VMEM_LIMIT_BYTES),
        )()

        # --- fused mask_d + mask_sum ------------------------------------------
        # One call, grid (B, nq, nk).  |d_i - d_j| and the Manhattan tile are
        # computed once per tile; mask_sum's NH heads are written from the same
        # base via a trace-time-unrolled scale loop.  Every output block is
        # written exactly once -> all grid axes are "parallel" (megacore).
        mask_d, mask_sum = pl.pallas_call(
            partial(_fused_mask_kernel, w=w, nh=NH),
            out_shape=(jax.ShapeDtypeStruct((B, 1, HW, HW), self.mask_dtype),
                       jax.ShapeDtypeStruct((B, NH, HW, HW), self.mask_dtype)),
            grid=(B, nq, nk),
            in_specs=[pl.BlockSpec(memory_space=pltpu.MemorySpace.SMEM),
                      pl.BlockSpec((1, tq, 1), lambda b, qi, ki: (b, qi, 0)),
                      pl.BlockSpec((1, 1, tk), lambda b, qi, ki: (b, 0, ki))],
            out_specs=(pl.BlockSpec((1, 1, tq, tk), lambda b, qi, ki: (b, 0, qi, ki)),
                       pl.BlockSpec((1, NH, tq, tk), lambda b, qi, ki: (b, 0, qi, ki))),
            compiler_params=pltpu.CompilerParams(
                dimension_semantics=("parallel", "parallel", "parallel"),
                vmem_limit_bytes=self.VMEM_LIMIT_BYTES),
        )(self.decay, depth_col, depth_row)

        return (sin, cos), mask_d, mask_1, mask_sum


# ----------------------------------------------------------------------------
# Pure-JAX reference (mirrors the PyTorch forward) for correctness checking
# ----------------------------------------------------------------------------
def geo_prior_reference(geo, slen, depth_map):
    h, w = slen
    HW = h * w
    depth = bilinear_resize_nchw(depth_map, h, w).astype(jnp.float32)
    index = jnp.arange(HW, dtype=jnp.float32)
    sin = jnp.sin(index[:, None] * geo.angle[None, :]).reshape(h, w, -1)
    cos = jnp.cos(index[:, None] * geo.angle[None, :]).reshape(h, w, -1)

    ih = jnp.arange(h, dtype=jnp.float32)
    iw = jnp.arange(w, dtype=jnp.float32)
    gh, gw = jnp.meshgrid(ih, iw, indexing="ij")
    grid = jnp.stack([gh, gw], axis=-1).reshape(HW, 2)
    mask_1 = jnp.abs(grid[:, None, :] - grid[None, :, :]).sum(-1)

    B = depth_map.shape[0]
    gd = depth.reshape(B, HW, 1)
    mask_d = jnp.abs(gd[:, :, None, :] - gd[:, None, :, :]).sum(-1)[:, None]   # (B,1,HW,HW)
    mask_sum = (0.85 * mask_1 + 0.15 * mask_d) * geo.decay[:, None, None]      # (B,NH,HW,HW)
    return (sin, cos), mask_d, mask_1, mask_sum


def _check(geo, slen, depth_map, out, sincos_tol, mask_tol=1e-5):
    (sin, cos), mask_d, mask_1, mask_sum = out
    (sin_r, cos_r), mask_d_r, mask_1_r, mask_sum_r = geo_prior_reference(geo, slen, depth_map)
    np.testing.assert_allclose(np.asarray(sin), np.asarray(sin_r),
                               rtol=sincos_tol, atol=sincos_tol)
    np.testing.assert_allclose(np.asarray(cos), np.asarray(cos_r),
                               rtol=sincos_tol, atol=sincos_tol)
    np.testing.assert_allclose(np.asarray(mask_d), np.asarray(mask_d_r),
                               rtol=mask_tol, atol=mask_tol)
    np.testing.assert_allclose(np.asarray(mask_1), np.asarray(mask_1_r),
                               rtol=mask_tol, atol=mask_tol)
    np.testing.assert_allclose(np.asarray(mask_sum), np.asarray(mask_sum_r),
                               rtol=mask_tol, atol=mask_tol)


if __name__ == "__main__":
    geo = GeoPriorPallas(embed_dim=128, num_heads=4, initial_value=2, heads_range=6)

    # Case 1: small demo shape (single-tile path).
    B, Hin, Win = 2, 16, 16
    slen = (8, 8)   # HW = 64
    depth_map = jax.random.uniform(jax.random.PRNGKey(0), (B, 1, Hin, Win),
                                   dtype=jnp.float32) * 5.0
    out = geo(slen, depth_map)
    jax.block_until_ready(out)
    _check(geo, slen, depth_map, out, sincos_tol=1e-4)

    # Case 2: the module's native feature-map size (480//20, 640//20) = (24, 32),
    # HW = 768 -> exercises the multi-tile grid path (384x384 tiles, 2x2 tiles).
    slen2 = (24, 32)
    depth_map2 = jax.random.uniform(jax.random.PRNGKey(1), (B, 1, 48, 64),
                                    dtype=jnp.float32) * 5.0
    out2 = geo(slen2, depth_map2)
    jax.block_until_ready(out2)
    _check(geo, slen2, depth_map2, out2, sincos_tol=1e-3)

    print("KERNEL_OK")
</pallas_src>

<mosaic_0001>
module attributes {stable_mosaic.version = 11 : i64} {
  func.func @_sincos_kernel(%arg0: i32, %arg1: memref<1x32xf32, #tpu.memory_space<vmem>>, %arg2: memref<64x32xf32, #tpu.memory_space<vmem>>, %arg3: memref<64x32xf32, #tpu.memory_space<vmem>>) attributes {dimension_semantics = [#tpu.dimension_semantics<parallel>], iteration_bounds = array<i64: 1>, scalar_prefetch = 0 : i64, scratch_operands = 0 : i64, tpu.core_type = #tpu.core_type<tc>, window_params = [{pipeline_mode = #tpu.pipeline_mode<synchronous>, transform_indices = @transform_0, window_bounds = array<i64: 1, 32>}, {transform_indices = @transform_1, window_bounds = array<i64: 64, 32>}, {transform_indices = @transform_2, window_bounds = array<i64: 64, 32>}]} {
    %c64_i32 = arith.constant 64 : i32
    %0 = arith.muli %arg0, %c64_i32 : i32
    %1 = tpu.iota {dimensions = array<i32: 0>} : vector<64x32xi32>
    %2 = vector.broadcast %0 : i32 to vector<64x32xi32>
    %3 = arith.addi %1, %2 : vector<64x32xi32>
    %4 = arith.sitofp %3 : vector<64x32xi32> to vector<64x32xf32>
    %c0 = arith.constant 0 : index
    %c0_0 = arith.constant 0 : index
    %5 = vector.load %arg1[%c0, %c0_0] : memref<1x32xf32, #tpu.memory_space<vmem>>, vector<1x32xf32>
    %6 = vector.broadcast %5 : vector<1x32xf32> to vector<64x32xf32>
    %7 = arith.mulf %4, %6 : vector<64x32xf32>
    %8 = math.sin %7 : vector<64x32xf32>
    %c0_1 = arith.constant 0 : index
    %c0_2 = arith.constant 0 : index
    %9 = vector.load %arg2[%c0_1, %c0_2] : memref<64x32xf32, #tpu.memory_space<vmem>>, vector<64x32xf32>
    tpu.vector_store %arg2[%c0_1, %c0_2], %8 {strides = array<i32>} : memref<64x32xf32, #tpu.memory_space<vmem>>, vector<64x32xf32>,
    %10 = math.cos %7 : vector<64x32xf32>
    %c0_3 = arith.constant 0 : index
    %c0_4 = arith.constant 0 : index
    %11 = vector.load %arg3[%c0_3, %c0_4] : memref<64x32xf32, #tpu.memory_space<vmem>>, vector<64x32xf32>
    tpu.vector_store %arg3[%c0_3, %c0_4], %10 {strides = array<i32>} : memref<64x32xf32, #tpu.memory_space<vmem>>, vector<64x32xf32>,
    return
  }
  func.func @transform_0(%arg0: i32) -> (i32, i32) {
    %c0_i32 = arith.constant 0 : i32
    %c0_i32_0 = arith.constant 0 : i32
    %c0_i32_1 = arith.constant 0 : i32
    return %c0_i32, %c0_i32_0 : i32, i32
  }
  func.func @transform_1(%arg0: i32) -> (i32, i32) {
    %c0_i32 = arith.constant 0 : i32
    %c0_i32_0 = arith.constant 0 : i32
    return %arg0, %c0_i32 : i32, i32
  }
  func.func @transform_2(%arg0: i32) -> (i32, i32) {
    %c0_i32 = arith.constant 0 : i32
    %c0_i32_0 = arith.constant 0 : i32
    return %arg0, %c0_i32 : i32, i32
  }
}

</mosaic_0001>

<llo_original>
// kernel: tpu_custom_call.1
$region0: #{tpu_custom_call.1}
  #allocation0 [shape = 'u32[]', space=smem, size = 0x4, offset = 0x4, fixed_abs, tag = 'smem constant byte address 0x4 - core index']
  #allocation1 [shape = 'u32[72,128]{1,0:T(1,128)}', space=vmem, size = 0x9000, scoped, tag = 'internal scratch']
  %s0 = inlined_call_operand.hbm [shape: f32[1,32], index: 0, kind: input, shape index: {}]
  %s1 = inlined_call_operand.vmem [shape: f32[64,32], index: 1, kind: output, shape index: {0}]
  %s2 = inlined_call_operand.vmem [shape: f32[64,32], index: 2, kind: output, shape index: {1}]
  %3 = xla_tuple %s1, %s2
  %s4 = sld [smem:[#allocation0]]
  $region26: #{tpu_custom_call.1} parent=0
    _
  %s6 = ssub.s32 1, %s4
  %s7 = scalar_select 0, %s6, %s4
  $region1: #{tpu_custom_call.1} parent=0
    #allocation2 [shape = 'u8[512]{0}', space=vmem, size = 0x400, scoped, tag = 'input window, operand 0, single buffered']
    #allocation3 [shape = 's32[1]{0}', space=sflag, size = 0x4, scoped, tag = 'scoped memory for tpu_custom_call.1']
    %8 = vsyncpa [#allocation3], 0
    // Predicated region
    $region2: #{tpu_custom_call.1} parent=1 // pred_check
      _
    $region3: #{tpu_custom_call.1} parent=1 // pred_check_branch
      %10 = sbr.rel (0) target = $region5
    $region4: #{tpu_custom_call.1} parent=1 // pred_region
      %12 = vsyncadd [#allocation3], 0
      %s14 = sshll.u32 %s0, 4
      %s15 = int_to_ptr.hbm [resolvable:$true] %s14
      %s16 = sshll.u32 [#allocation2], 4
      %s17 = int_to_ptr.vmem [resolvable:$true] %s16
      %19 = dma.hbm_to_vmem [thread:$0]  %s15, 16, %s17, [#allocation3]
    $region5: #{tpu_custom_call.1} parent=1 // pred_fallthru
      _
    // Predicated region
    $region6: #{tpu_custom_call.1} parent=1 // pred_check
      _
    $region7: #{tpu_custom_call.1} parent=1 // pred_check_branch
      %21 = sbr.rel (0) target = $region9
    $region8: #{tpu_custom_call.1} parent=1 // pred_region
      %23 = dma.done [#allocation3], 16
    $region9: #{tpu_custom_call.1} parent=1 // pred_fallthru
      _
    %s24 = smul.u32 0, 64
    %v25 = vlaneseq
    %v26 = vshrl.u32 %v25, 7
    %v27 = vadd.s32 %v26, 8
    %v28 = vadd.s32 %v26, 16
    %v29 = vadd.s32 %v26, 24
    %v30 = vadd.s32 %v26, 32
    %v31 = vadd.s32 %v26, 40
    %v32 = vadd.s32 %v26, 48
    %v33 = vadd.s32 %v26, 56
    %v34 = vstv %s24
    %v35 = vadd.s32 %v26, %v34
    %v36 = vadd.s32 %v27, %v34
    %v37 = vadd.s32 %v28, %v34
    %v38 = vadd.s32 %v29, %v34
    %v39 = vadd.s32 %v30, %v34
    %v40 = vadd.s32 %v31, %v34
    %v41 = vadd.s32 %v32, %v34
    %v42 = vadd.s32 %v33, %v34
    %v43 = vcvt.s32.f32 %v35
    %v44 = vcvt.s32.f32 %v36
    %v45 = vcvt.s32.f32 %v37
    %v46 = vcvt.s32.f32 %v38
    %v47 = vcvt.s32.f32 %v39
    %v48 = vcvt.s32.f32 %v40
    %v49 = vcvt.s32.f32 %v41
    %v50 = vcvt.s32.f32 %v42
    %v51 = vld [vmem:[#allocation2] sm:$0x1]
    %v53 = vperm.slane %v51, 0
    %v55 = vmul.f32 %v43, %v53
    %v56 = vmul.f32 %v44, %v53
    %v57 = vmul.f32 %v45, %v53
    %v58 = vmul.f32 %v46, %v53
    %v59 = vmul.f32 %v47, %v53
    %v60 = vmul.f32 %v48, %v53
    %v61 = vmul.f32 %v49, %v53
    %v62 = vmul.f32 %v50, %v53
    %v63 = vand.u32 2147483647, %v55
    %vm64 = vcmp.le.f32.partialorder %v63, 0.7853982
    %vm65 = vcmp.lt.s32.totalorder %v55, 0
    %v66 = vand.u32 %v55, 2139095040
    %v67 = vshrl.u32 %v66, 23
    %v68 = vsub.s32 %v67, 127
    %v69 = vand.u32 2147483647, %v55
    %v70 = vand.u32 %v69, 8388607
    %v71 = vor.u32 %v70, 8388608
    %v72 = vsub.s32 0, %v71
    %v73 = vadd.s32 %v68, 1
    %vm74 = vcmp.gt.s32.totalorder %v73, 0
    %v75 = vsel %vm74, %v73, 0
    %v76 = vshrl.u32 %v75, 5
    %v77 = vand.u32 %v75, 31
    %v78 = vsub.s32 32, %v77
    %v79 = vshrl.u32 683565275, %v78
    %v80 = vshll.u32 683565275, %v77
    %v81 = vshrl.u32 2475754826, %v78
    %v82 = vor.u32 %v80, %v81
    %v83 = vshll.u32 2475754826, %v77
    %v84 = vshrl.u32 2131351028, %v78
    %v85 = vor.u32 %v83, %v84
    %v86 = vshll.u32 2131351028, %v77
    %v87 = vshrl.u32 2102212464, %v78
    %v88 = vor.u32 %v86, %v87
    %v89 = vshll.u32 2102212464, %v77
    %v90 = vshrl.u32 920167782, %v78
    %v91 = vor.u32 %v89, %v90
    %v92 = vshll.u32 920167782, %v77
    %v93 = vshrl.u32 1326507024, %v78
    %v94 = vor.u32 %v92, %v93
    %vm95 = vcmp.lt.s32.totalorder %v76, 1
    %vm96 = vcmp.lt.s32.totalorder %v76, 2
    %vm97 = vcmp.lt.s32.totalorder %v76, 3
    %vm98 = vcmp.lt.s32.totalorder %v76, 4
    %v99 = vsel %vm95, %v79, %v82
    %v100 = vsel %vm98, %v88, 2102212464
    %v101 = vsel %vm97, %v85, %v100
    %v102 = vsel %vm96, %v99, %v101
    %v103 = vsel %vm95, %v82, %v85
    %v104 = vsel %vm98, %v91, 920167782
    %v105 = vsel %vm97, %v88, %v104
    %v106 = vsel %vm96, %v103, %v105
    %v107 = vsel %vm95, %v85, %v88
    %v108 = vsel %vm98, %v94, 1326507024
    %v109 = vsel %vm97, %v91, %v108
    %v110 = vsel %vm96, %v107, %v109
    %v111 = vshll.u32 %v71, 8
    %v112 = vand.u32 %v111, 65535
    %v113 = vshrl.u32 %v111, 16
    %v114 = vand.u32 %v110, 65535
    %v115 = vshrl.u32 %v110, 16
    %v116 = vmul.u32 %v112, %v114
    %v117 = vmul.u32 %v112, %v115
    %v118 = vmul.u32 %v113, %v114
    %v119 = vmul.u32 %v113, %v115
    %v120 = vshll.u32 %v117, 16
    %v121 = vshrl.u32 %v117, 16
    %v122 = vshll.u32 %v118, 16
    %v123 = vshrl.u32 %v118, 16
    %vm124 = vc.u32 %v116, %v120
    %v125 = vsel %vm124, 1, 0
    %v126 = vadd.s32 %v116, %v120
    %v127 = vadd.s32 %v119, %v125
    %vm128 = vc.u32 %v126, %v122
    %v129 = vsel %vm128, 1, 0
    %v130 = vadd.s32 %v126, %v122
    %v131 = vadd.s32 %v127, %v129
    %v132 = vadd.s32 %v131, %v121
    %v133 = vadd.s32 %v132, %v123
    %v134 = vand.u32 %v111, 65535
    %v135 = vshrl.u32 %v111, 16
    %v136 = vand.u32 %v106, 65535
    %v137 = vshrl.u32 %v106, 16
    %v138 = vmul.u32 %v134, %v136
    %v139 = vmul.u32 %v134, %v137
    %v140 = vmul.u32 %v135, %v136
    %v141 = vmul.u32 %v135, %v137
    %v142 = vshll.u32 %v139, 16
    %v143 = vshrl.u32 %v139, 16
    %v144 = vshll.u32 %v140, 16
    %v145 = vshrl.u32 %v140, 16
    %vm146 = vc.u32 %v138, %v142
    %v147 = vsel %vm146, 1, 0
    %v148 = vadd.s32 %v138, %v142
    %v149 = vadd.s32 %v141, %v147
    %vm150 = vc.u32 %v148, %v144
    %v151 = vsel %vm150, 1, 0
    %v152 = vadd.s32 %v148, %v144
    %v153 = vadd.s32 %v149, %v151
    %v154 = vadd.s32 %v153, %v143
    %v155 = vadd.s32 %v154, %v145
    %v156 = vmul.u32 %v111, %v102
    %v157 = vadd.s32 %v133, %v152
    %vm158 = vc.u32 %v133, %v152
    %v159 = vadd.s32 %v155, 1
    %v160 = vsel %vm158, %v159, %v155
    %v161 = vadd.s32 %v156, %v160
    %v162 = vadd.s32 %v161, 536870912
    %v163 = vshrl.u32 %v162, 30
    %v164 = vshll.u32 %v163, 30
    %v165 = vsub.s32 %v161, %v164
    %vm166 = vcmp.lt.s32.totalorder %v165, 0
    %v167 = vsub.s32 0, %v165
    %v168 = vsel %vm166, %v167, %v165
    %v169 = vclz %v168
    %v170 = vsub.s32 %v169, 2
    %vm171 = vcmp.gt.s32.totalorder 0, %v170
    %v172 = vsel %vm171, 0, %v170
    %v173 = vsub.s32 32, %v172
    %v174 = vshll.u32 %v165, %v172
    %v175 = vshrl.u32 %v157, %v173
    %v176 = vor.u32 %v174, %v175
    %v177 = vsub.s32 4294967266, %v172
    %v178 = vadd.s32 %v177, 127
    %v179 = vshll.u32 %v178, 23
    %v180 = vor.u32 4788187, %v179
    %v181 = vand.u32 2147483647, %v180
    %v183 = vcvt.s32.f32 %v176
    %v184 = vmul.f32 %v183, %v181
    %v185 = vxor.u32 %v184, 2147483648
    %v186 = vsel %vm65, %v185, %v184
    %v187 = vsub.s32 4, %v163
    %v188 = vsel %vm65, %v187, %v163
    %v189 = vsel %vm64, %v55, %v186
    %v190 = vsel %vm64, 0, %v188
    %v191 = vmul.f32 %v189, %v189
    %v192 = vmul.f32 %v191, -0.001358992
    %v193 = vadd.f32 %v192, 0.041655596
    %v194 = vmul.f32 %v191, %v193
    %v195 = vadd.f32 %v194, -0.4999988
    %v196 = vmul.f32 %v191, %v195
    %v197 = vadd.f32 1.0, %v196
    %v198 = vmul.f32 %v189, %v189
    %v199 = vmul.f32 %v198, -0.00019511016
    %v200 = vadd.f32 %v199, 0.008332121
    %v201 = vmul.f32 %v198, %v200
    %v202 = vadd.f32 %v201, -0.16666654
    %v203 = vmul.f32 %v198, %v202
    %v204 = vadd.f32 %v203, 1.0
    %v205 = vmul.f32 %v204, %v189
    %vm206 = vweird.f32 %v55
    %v207 = vadd.s32 %v190, 3
    %v208 = vand.u32 %v207, 3
    %vm209 = vcmp.lt.s32.totalorder %v208, 2
    %vm210 = vcmp.eq.s32.totalorder %v208, 0
    %v211 = vxor.u32 %v205, 2147483648
    %v212 = vsel %vm210, %v197, %v211
    %vm213 = vcmp.eq.s32.totalorder %v208, 2
    %v214 = vxor.u32 %v197, 2147483648
    %v215 = vsel %vm213, %v214, %v205
    %v216 = vsel %vm209, %v212, %v215
    %v217 = vsel %vm206, nan, %v216
    %v218 = vand.u32 2147483647, %v56
    %vm219 = vcmp.le.f32.partialorder %v218, 0.7853982
    %vm220 = vcmp.lt.s32.totalorder %v56, 0
    %v221 = vand.u32 %v56, 2139095040
    %v222 = vshrl.u32 %v221, 23
    %v223 = vsub.s32 %v222, 127
    %v224 = vand.u32 2147483647, %v56
    %v225 = vand.u32 %v224, 8388607
    %v226 = vor.u32 %v225, 8388608
    %v227 = vsub.s32 0, %v226
    %v228 = vadd.s32 %v223, 1
    %vm229 = vcmp.gt.s32.totalorder %v228, 0
    %v230 = vsel %vm229, %v228, 0
    %v231 = vshrl.u32 %v230, 5
    %v232 = vand.u32 %v230, 31
    %v233 = vsub.s32 32, %v232
    %v234 = vshrl.u32 683565275, %v233
    %v235 = vshll.u32 683565275, %v232
    %v236 = vshrl.u32 2475754826, %v233
    %v237 = vor.u32 %v235, %v236
    %v238 = vshll.u32 2475754826, %v232
    %v239 = vshrl.u32 2131351028, %v233
    %v240 = vor.u32 %v238, %v239
    %v241 = vshll.u32 2131351028, %v232
    %v242 = vshrl.u32 2102212464, %v233
    %v243 = vor.u32 %v241, %v242
    %v244 = vshll.u32 2102212464, %v232
    %v245 = vshrl.u32 920167782, %v233
    %v246 = vor.u32 %v244, %v245
    %v247 = vshll.u32 920167782, %v232
    %v248 = vshrl.u32 1326507024, %v233
    %v249 = vor.u32 %v247, %v248
    %vm250 = vcmp.lt.s32.totalorder %v231, 1
    %vm251 = vcmp.lt.s32.totalorder %v231, 2
    %vm252 = vcmp.lt.s32.totalorder %v231, 3
    %vm253 = vcmp.lt.s32.totalorder %v231, 4
    %v254 = vsel %vm250, %v234, %v237
    %v255 = vsel %vm253, %v243, 2102212464
    %v256 = vsel %vm252, %v240, %v255
    %v257 = vsel %vm251, %v254, %v256
    %v258 = vsel %vm250, %v237, %v240
    %v259 = vsel %vm253, %v246, 920167782
    %v260 = vsel %vm252, %v243, %v259
    %v261 = vsel %vm251, %v258, %v260
    %v262 = vsel %vm250, %v240, %v243
    %v263 = vsel %vm253, %v249, 1326507024
    %v264 = vsel %vm252, %v246, %v263
    %v265 = vsel %vm251, %v262, %v264
    %v266 = vshll.u32 %v226, 8
    %v267 = vand.u32 %v266, 65535
    %v268 = vshrl.u32 %v266, 16
    %v269 = vand.u32 %v265, 65535
    %v270 = vshrl.u32 %v265, 16
    %v271 = vmul.u32 %v267, %v269
    %v272 = vmul.u32 %v267, %v270
    %v273 = vmul.u32 %v268, %v269
    %v274 = vmul.u32 %v268, %v270
    %v275 = vshll.u32 %v272, 16
    %v276 = vshrl.u32 %v272, 16
    %v277 = vshll.u32 %v273, 16
    %v278 = vshrl.u32 %v273, 16
    %vm279 = vc.u32 %v271, %v275
    %v280 = vsel %vm279, 1, 0
    %v281 = vadd.s32 %v271, %v275
    %v282 = vadd.s32 %v274, %v280
    %vm283 = vc.u32 %v281, %v277
    %v284 = vsel %vm283, 1, 0
    %v285 = vadd.s32 %v281, %v277
    %v286 = vadd.s32 %v282, %v284
    %v287 = vadd.s32 %v286, %v276
    %v288 = vadd.s32 %v287, %v278
    %v289 = vand.u32 %v266, 65535
    %v290 = vshrl.u32 %v266, 16
    %v291 = vand.u32 %v261, 65535
    %v292 = vshrl.u32 %v261, 16
    %v293 = vmul.u32 %v289, %v291
    %v294 = vmul.u32 %v289, %v292
    %v295 = vmul.u32 %v290, %v291
    %v296 = vmul.u32 %v290, %v292
    %v297 = vshll.u32 %v294, 16
    %v298 = vshrl.u32 %v294, 16
    %v299 = vshll.u32 %v295, 16
    %v300 = vshrl.u32 %v295, 16
    %vm301 = vc.u32 %v293, %v297
    %v302 = vsel %vm301, 1, 0
    %v303 = vadd.s32 %v293, %v297
    %v304 = vadd.s32 %v296, %v302
    %vm305 = vc.u32 %v303, %v299
    %v306 = vsel %vm305, 1, 0
    %v307 = vadd.s32 %v303, %v299
    %v308 = vadd.s32 %v304, %v306
    %v309 = vadd.s32 %v308, %v298
    %v310 = vadd.s32 %v309, %v300
    %v311 = vmul.u32 %v266, %v257
    %v312 = vadd.s32 %v288, %v307
    %vm313 = vc.u32 %v288, %v307
    %v314 = vadd.s32 %v310, 1
    %v315 = vsel %vm313, %v314, %v310
    %v316 = vadd.s32 %v311, %v315
    %v317 = vadd.s32 %v316, 536870912
    %v318 = vshrl.u32 %v317, 30
    %v319 = vshll.u32 %v318, 30
    %v320 = vsub.s32 %v316, %v319
    %vm321 = vcmp.lt.s32.totalorder %v320, 0
    %v322 = vsub.s32 0, %v320
    %v323 = vsel %vm321, %v322, %v320
    %v324 = vclz %v323
    %v325 = vsub.s32 %v324, 2
    %vm326 = vcmp.gt.s32.totalorder 0, %v325
    %v327 = vsel %vm326, 0, %v325
    %v328 = vsub.s32 32, %v327
    %v329 = vshll.u32 %v320, %v327
    %v330 = vshrl.u32 %v312, %v328
    %v331 = vor.u32 %v329, %v330
    %v332 = vsub.s32 4294967266, %v327
    %v333 = vadd.s32 %v332, 127
    %v334 = vshll.u32 %v333, 23
    %v335 = vor.u32 4788187, %v334
    %v336 = vand.u32 2147483647, %v335
    %v338 = vcvt.s32.f32 %v331
    %v339 = vmul.f32 %v338, %v336
    %v340 = vxor.u32 %v339, 2147483648
    %v341 = vsel %vm220, %v340, %v339
    %v342 = vsub.s32 4, %v318
    %v343 = vsel %vm220, %v342, %v318
    %v344 = vsel %vm219, %v56, %v341
    %v345 = vsel %vm219, 0, %v343
    %v346 = vmul.f32 %v344, %v344
    %v347 = vmul.f32 %v346, -0.001358992
    %v348 = vadd.f32 %v347, 0.041655596
    %v349 = vmul.f32 %v346, %v348
    %v350 = vadd.f32 %v349, -0.4999988
    %v351 = vmul.f32 %v346, %v350
    %v352 = vadd.f32 1.0, %v351
    %v353 = vmul.f32 %v344, %v344
    %v354 = vmul.f32 %v353, -0.00019511016
    %v355 = vadd.f32 %v354, 0.008332121
    %v356 = vmul.f32 %v353, %v355
    %v357 = vadd.f32 %v356, -0.16666654
    %v358 = vmul.f32 %v353, %v357
    %v359 = vadd.f32 %v358, 1.0
    %v360 = vmul.f32 %v359, %v344
    %vm361 = vweird.f32 %v56
    %v362 = vadd.s32 %v345, 3
    %v363 = vand.u32 %v362, 3
    %vm364 = vcmp.lt.s32.totalorder %v363, 2
    %vm365 = vcmp.eq.s32.totalorder %v363, 0
    %v366 = vxor.u32 %v360, 2147483648
    %v367 = vsel %vm365, %v352, %v366
    %vm368 = vcmp.eq.s32.totalorder %v363, 2
    %v369 = vxor.u32 %v352, 2147483648
    %v370 = vsel %vm368, %v369, %v360
    %v371 = vsel %vm364, %v367, %v370
    %v372 = vsel %vm361, nan, %v371
    %v373 = vand.u32 2147483647, %v57
    %vm374 = vcmp.le.f32.partialorder %v373, 0.7853982
    %vm375 = vcmp.lt.s32.totalorder %v57, 0
    %v376 = vand.u32 %v57, 2139095040
    %v377 = vshrl.u32 %v376, 23
    %v378 = vsub.s32 %v377, 127
    %v379 = vand.u32 2147483647, %v57
    %v380 = vand.u32 %v379, 8388607
    %v381 = vor.u32 %v380, 8388608
    %v382 = vsub.s32 0, %v381
    %v383 = vadd.s32 %v378, 1
    %vm384 = vcmp.gt.s32.totalorder %v383, 0
    %v385 = vsel %vm384, %v383, 0
    %v386 = vshrl.u32 %v385, 5
    %v387 = vand.u32 %v385, 31
    %v388 = vsub.s32 32, %v387
    %v389 = vshrl.u32 683565275, %v388
    %v390 = vshll.u32 683565275, %v387
    %v391 = vshrl.u32 2475754826, %v388
    %v392 = vor.u32 %v390, %v391
    %v393 = vshll.u32 2475754826, %v387
    %v394 = vshrl.u32 2131351028, %v388
    %v395 = vor.u32 %v393, %v394
    %v396 = vshll.u32 2131351028, %v387
    %v397 = vshrl.u32 2102212464, %v388
    %v398 = vor.u32 %v396, %v397
    %v399 = vshll.u32 2102212464, %v387
    %v400 = vshrl.u32 920167782, %v388
    %v401 = vor.u32 %v399, %v400
    %v402 = vshll.u32 920167782, %v387
    %v403 = vshrl.u32 1326507024, %v388
    %v404 = vor.u32 %v402, %v403
    %vm405 = vcmp.lt.s32.totalorder %v386, 1
    %vm406 = vcmp.lt.s32.totalorder %v386, 2
    %vm407 = vcmp.lt.s32.totalorder %v386, 3
    %vm408 = vcmp.lt.s32.totalorder %v386, 4
    %v409 = vsel %vm405, %v389, %v392
    %v410 = vsel %vm408, %v398, 2102212464
    %v411 = vsel %vm407, %v395, %v410
    %v412 = vsel %vm406, %v409, %v411
    %v413 = vsel %vm405, %v392, %v395
    %v414 = vsel %vm408, %v401, 920167782
    %v415 = vsel %vm407, %v398, %v414
    %v416 = vsel %vm406, %v413, %v415
    %v417 = vsel %vm405, %v395, %v398
    %v418 = vsel %vm408, %v404, 1326507024
    %v419 = vsel %vm407, %v401, %v418
    %v420 = vsel %vm406, %v417, %v419
    %v421 = vshll.u32 %v381, 8
    %v422 = vand.u32 %v421, 65535
    %v423 = vshrl.u32 %v421, 16
    %v424 = vand.u32 %v420, 65535
    %v425 = vshrl.u32 %v420, 16
    %v426 = vmul.u32 %v422, %v424
    %v427 = vmul.u32 %v422, %v425
    %v428 = vmul.u32 %v423, %v424
    %v429 = vmul.u32 %v423, %v425
    %v430 = vshll.u32 %v427, 16
    %v431 = vshrl.u32 %v427, 16
    %v432 = vshll.u32 %v428, 16
    %v433 = vshrl.u32 %v428, 16
    %vm434 = vc.u32 %v426, %v430
    %v435 = vsel %vm434, 1, 0
    %v436 = vadd.s32 %v426, %v430
    %v437 = vadd.s32 %v429, %v435
    %vm438 = vc.u32 %v436, %v432
    %v439 = vsel %vm438, 1, 0
    %v440 = vadd.s32 %v436, %v432
    %v441 = vadd.s32 %v437, %v439
    %v442 = vadd.s32 %v441, %v431
    %v443 = vadd.s32 %v442, %v433
    %v444 = vand.u32 %v421, 65535
    %v445 = vshrl.u32 %v421, 16
    %v446 = vand.u32 %v416, 65535
    %v447 = vshrl.u32 %v416, 16
    %v448 = vmul.u32 %v444, %v446
    %v449 = vmul.u32 %v444, %v447
    %v450 = vmul.u32 %v445, %v446
    %v451 = vmul.u32 %v445, %v447
    %v452 = vshll.u32 %v449, 16
    %v453 = vshrl.u32 %v449, 16
    %v454 = vshll.u32 %v450, 16
    %v455 = vshrl.u32 %v450, 16
    %vm456 = vc.u32 %v448, %v452
    %v457 = vsel %vm456, 1, 0
    %v458 = vadd.s32 %v448, %v452
    %v459 = vadd.s32 %v451, %v457
    %vm460 = vc.u32 %v458, %v454
    %v461 = vsel %vm460, 1, 0
    %v462 = vadd.s32 %v458, %v454
    %v463 = vadd.s32 %v459, %v461
    %v464 = vadd.s32 %v463, %v453
    %v465 = vadd.s32 %v464, %v455
    %v466 = vmul.u32 %v421, %v412
    %v467 = vadd.s32 %v443, %v462
    %vm468 = vc.u32 %v443, %v462
    %v469 = vadd.s32 %v465, 1
    %v470 = vsel %vm468, %v469, %v465
    %v471 = vadd.s32 %v466, %v470
    %v472 = vadd.s32 %v471, 536870912
    %v473 = vshrl.u32 %v472, 30
    %v474 = vshll.u32 %v473, 30
    %v475 = vsub.s32 %v471, %v474
    %vm476 = vcmp.lt.s32.totalorder %v475, 0
    %v477 = vsub.s32 0, %v475
    %v478 = vsel %vm476, %v477, %v475
    %v479 = vclz %v478
    %v480 = vsub.s32 %v479, 2
    %vm481 = vcmp.gt.s32.totalorder 0, %v480
    %v482 = vsel %vm481, 0, %v480
    %v483 = vsub.s32 32, %v482
    %v484 = vshll.u32 %v475, %v482
    %v485 = vshrl.u32 %v467, %v483
    %v486 = vor.u32 %v484, %v485
    %v487 = vsub.s32 4294967266, %v482
    %v488 = vadd.s32 %v487, 127
    %v489 = vshll.u32 %v488, 23
    %v490 = vor.u32 4788187, %v489
    %v491 = vand.u32 2147483647, %v490
    %v493 = vcvt.s32.f32 %v486
    %v494 = vmul.f32 %v493, %v491
    %v495 = vxor.u32 %v494, 2147483648
    %v496 = vsel %vm375, %v495, %v494
    %v497 = vsub.s32 4, %v473
    %v498 = vsel %vm375, %v497, %v473
    %v499 = vsel %vm374, %v57, %v496
    %v500 = vsel %vm374, 0, %v498
    %v501 = vmul.f32 %v499, %v499
    %v502 = vmul.f32 %v501, -0.001358992
    %v503 = vadd.f32 %v502, 0.041655596
    %v504 = vmul.f32 %v501, %v503
    %v505 = vadd.f32 %v504, -0.4999988
    %v506 = vmul.f32 %v501, %v505
    %v507 = vadd.f32 1.0, %v506
    %v508 = vmul.f32 %v499, %v499
    %v509 = vmul.f32 %v508, -0.00019511016
    %v510 = vadd.f32 %v509, 0.008332121
    %v511 = vmul.f32 %v508, %v510
    %v512 = vadd.f32 %v511, -0.16666654
    %v513 = vmul.f32 %v508, %v512
    %v514 = vadd.f32 %v513, 1.0
    %v515 = vmul.f32 %v514, %v499
    %vm516 = vweird.f32 %v57
    %v517 = vadd.s32 %v500, 3
    %v518 = vand.u32 %v517, 3
    %vm519 = vcmp.lt.s32.totalorder %v518, 2
    %vm520 = vcmp.eq.s32.totalorder %v518, 0
    %v521 = vxor.u32 %v515, 2147483648
    %v522 = vsel %vm520, %v507, %v521
    %vm523 = vcmp.eq.s32.totalorder %v518, 2
    %v524 = vxor.u32 %v507, 2147483648
    %v525 = vsel %vm523, %v524, %v515
    %v526 = vsel %vm519, %v522, %v525
    %v527 = vsel %vm516, nan, %v526
    %v528 = vand.u32 2147483647, %v58
    %vm529 = vcmp.le.f32.partialorder %v528, 0.7853982
    %vm530 = vcmp.lt.s32.totalorder %v58, 0
    %v531 = vand.u32 %v58, 2139095040
    %v532 = vshrl.u32 %v531, 23
    %v533 = vsub.s32 %v532, 127
    %v534 = vand.u32 2147483647, %v58
    %v535 = vand.u32 %v534, 8388607
    %v536 = vor.u32 %v535, 8388608
    %v537 = vsub.s32 0, %v536
    %v538 = vadd.s32 %v533, 1
    %vm539 = vcmp.gt.s32.totalorder %v538, 0
    %v540 = vsel %vm539, %v538, 0
    %v541 = vshrl.u32 %v540, 5
    %v542 = vand.u32 %v540, 31
    %v543 = vsub.s32 32, %v542
    %v544 = vshrl.u32 683565275, %v543
    %v545 = vshll.u32 683565275, %v542
    %v546 = vshrl.u32 2475754826, %v543
    %v547 = vor.u32 %v545, %v546
    %v548 = vshll.u32 2475754826, %v542
    %v549 = vshrl.u32 2131351028, %v543
    %v550 = vor.u32 %v548, %v549
    %v551 = vshll.u32 2131351028, %v542
    %v552 = vshrl.u32 2102212464, %v543
    %v553 = vor.u32 %v551, %v552
    %v554 = vshll.u32 2102212464, %v542
    %v555 = vshrl.u32 920167782, %v543
    %v556 = vor.u32 %v554, %v555
    %v557 = vshll.u32 920167782, %v542
    %v558 = vshrl.u32 1326507024, %v543
    %v559 = vor.u32 %v557, %v558
    %vm560 = vcmp.lt.s32.totalorder %v541, 1
    %vm561 = vcmp.lt.s32.totalorder %v541, 2
    %vm562 = vcmp.lt.s32.totalorder %v541, 3
    %vm563 = vcmp.lt.s32.totalorder %v541, 4
    %v564 = vsel %vm560, %v544, %v547
    %v565 = vsel %vm563, %v553, 2102212464
    %v566 = vsel %vm562, %v550, %v565
    %v567 = vsel %vm561, %v564, %v566
    %v568 = vsel %vm560, %v547, %v550
    %v569 = vsel %vm563, %v556, 920167782
    %v570 = vsel %vm562, %v553, %v569
    %v571 = vsel %vm561, %v568, %v570
    %v572 = vsel %vm560, %v550, %v553
    %v573 = vsel %vm563, %v559, 1326507024
    %v574 = vsel %vm562, %v556, %v573
    %v575 = vsel %vm561, %v572, %v574
    %v576 = vshll.u32 %v536, 8
    %v577 = vand.u32 %v576, 65535
    %v578 = vshrl.u32 %v576, 16
    %v579 = vand.u32 %v575, 65535
    %v580 = vshrl.u32 %v575, 16
    %v581 = vmul.u32 %v577, %v579
    %v582 = vmul.u32 %v577, %v580
    %v583 = vmul.u32 %v578, %v579
    %v584 = vmul.u32 %v578, %v580
    %v585 = vshll.u32 %v582, 16
    %v586 = vshrl.u32 %v582, 16
    %v587 = vshll.u32 %v583, 16
    %v588 = vshrl.u32 %v583, 16
    %vm589 = vc.u32 %v581, %v585
    %v590 = vsel %vm589, 1, 0
    %v591 = vadd.s32 %v581, %v585
    %v592 = vadd.s32 %v584, %v590
    %vm593 = vc.u32 %v591, %v587
    %v594 = vsel %vm593, 1, 0
    %v595 = vadd.s32 %v591, %v587
    %v596 = vadd.s32 %v592, %v594
    %v597 = vadd.s32 %v596, %v586
    %v598 = vadd.s32 %v597, %v588
    %v599 = vand.u32 %v576, 65535
    %v600 = vshrl.u32 %v576, 16
    %v601 = vand.u32 %v571, 65535
    %v602 = vshrl.u32 %v571, 16
    %v603 = vmul.u32 %v599, %v601
    %v604 = vmul.u32 %v599, %v602
    %v605 = vmul.u32 %v600, %v601
    %v606 = vmul.u32 %v600, %v602
    %v607 = vshll.u32 %v604, 16
    %v608 = vshrl.u32 %v604, 16
    %v609 = vshll.u32 %v605, 16
    %v610 = vshrl.u32 %v605, 16
    %vm611 = vc.u32 %v603, %v607
    %v612 = vsel %vm611, 1, 0
    %v613 = vadd.s32 %v603, %v607
    %v614 = vadd.s32 %v606, %v612
    %vm615 = vc.u32 %v613, %v609
    %v616 = vsel %vm615, 1, 0
    %v617 = vadd.s32 %v613, %v609
    %v618 = vadd.s32 %v614, %v616
    %v619 = vadd.s32 %v618, %v608
    %v620 = vadd.s32 %v619, %v610
    %v621 = vmul.u32 %v576, %v567
    %v622 = vadd.s32 %v598, %v617
    %vm623 = vc.u32 %v598, %v617
    %v624 = vadd.s32 %v620, 1
    %v625 = vsel %vm623, %v624, %v620
    %v626 = vadd.s32 %v621, %v625
    %v627 = vadd.s32 %v626, 536870912
    %v628 = vshrl.u32 %v627, 30
    %v629 = vshll.u32 %v628, 30
    %v630 = vsub.s32 %v626, %v629
    %vm631 = vcmp.lt.s32.totalorder %v630, 0
    %v632 = vsub.s32 0, %v630
    %v633 = vsel %vm631, %v632, %v630
    %v634 = vclz %v633
    %v635 = vsub.s32 %v634, 2
    %vm636 = vcmp.gt.s32.totalorder 0, %v635
    %v637 = vsel %vm636, 0, %v635
    %v638 = vsub.s32 32, %v637
    %v639 = vshll.u32 %v630, %v637
    %v640 = vshrl.u32 %v622, %v638
    %v641 = vor.u32 %v639, %v640
    %v642 = vsub.s32 4294967266, %v637
    %v643 = vadd.s32 %v642, 127
    %v644 = vshll.u32 %v643, 23
    %v645 = vor.u32 4788187, %v644
    %v646 = vand.u32 2147483647, %v645
    %v648 = vcvt.s32.f32 %v641
    %v649 = vmul.f32 %v648, %v646
    %v650 = vxor.u32 %v649, 2147483648
    %v651 = vsel %vm530, %v650, %v649
    %v652 = vsub.s32 4, %v628
    %v653 = vsel %vm530, %v652, %v628
    %v654 = vsel %vm529, %v58, %v651
    %v655 = vsel %vm529, 0, %v653
    %v656 = vmul.f32 %v654, %v654
    %v657 = vmul.f32 %v656, -0.001358992
    %v658 = vadd.f32 %v657, 0.041655596
    %v659 = vmul.f32 %v656, %v658
    %v660 = vadd.f32 %v659, -0.4999988
    %v661 = vmul.f32 %v656, %v660
    %v662 = vadd.f32 1.0, %v661
    %v663 = vmul.f32 %v654, %v654
    %v664 = vmul.f32 %v663, -0.00019511016
    %v665 = vadd.f32 %v664, 0.008332121
    %v666 = vmul.f32 %v663, %v665
    %v667 = vadd.f32 %v666, -0.16666654
    %v668 = vmul.f32 %v663, %v667
    %v669 = vadd.f32 %v668, 1.0
    %v670 = vmul.f32 %v669, %v654
    %vm671 = vweird.f32 %v58
    %v672 = vadd.s32 %v655, 3
    %v673 = vand.u32 %v672, 3
    %vm674 = vcmp.lt.s32.totalorder %v673, 2
    %vm675 = vcmp.eq.s32.totalorder %v673, 0
    %v676 = vxor.u32 %v670, 2147483648
    %v677 = vsel %vm675, %v662, %v676
    %vm678 = vcmp.eq.s32.totalorder %v673, 2
    %v679 = vxor.u32 %v662, 2147483648
    %v680 = vsel %vm678, %v679, %v670
    %v681 = vsel %vm674, %v677, %v680
    %v682 = vsel %vm671, nan, %v681
    %v683 = vand.u32 2147483647, %v59
    %vm684 = vcmp.le.f32.partialorder %v683, 0.7853982
    %vm685 = vcmp.lt.s32.totalorder %v59, 0
    %v686 = vand.u32 %v59, 2139095040
    %v687 = vshrl.u32 %v686, 23
    %v688 = vsub.s32 %v687, 127
    %v689 = vand.u32 2147483647, %v59
    %v690 = vand.u32 %v689, 8388607
    %v691 = vor.u32 %v690, 8388608
    %v692 = vsub.s32 0, %v691
    %v693 = vadd.s32 %v688, 1
    %vm694 = vcmp.gt.s32.totalorder %v693, 0
    %v695 = vsel %vm694, %v693, 0
    %v696 = vshrl.u32 %v695, 5
    %v697 = vand.u32 %v695, 31
    %v698 = vsub.s32 32, %v697
    %v699 = vshrl.u32 683565275, %v698
    %v700 = vshll.u32 683565275, %v697
    %v701 = vshrl.u32 2475754826, %v698
    %v702 = vor.u32 %v700, %v701
    %v703 = vshll.u32 2475754826, %v697
    %v704 = vshrl.u32 2131351028, %v698
    %v705 = vor.u32 %v703, %v704
    %v706 = vshll.u32 2131351028, %v697
    %v707 = vshrl.u32 2102212464, %v698
    %v708 = vor.u32 %v706, %v707
    %v709 = vshll.u32 2102212464, %v697
    %v710 = vshrl.u32 920167782, %v698
    %v711 = vor.u32 %v709, %v710
    %v712 = vshll.u32 920167782, %v697
    %v713 = vshrl.u32 1326507024, %v698
    %v714 = vor.u32 %v712, %v713
    %vm715 = vcmp.lt.s32.totalorder %v696, 1
    %vm716 = vcmp.lt.s32.totalorder %v696, 2
    %vm717 = vcmp.lt.s32.totalorder %v696, 3
    %vm718 = vcmp.lt.s32.totalorder %v696, 4
    %v719 = vsel %vm715, %v699, %v702
    %v720 = vsel %vm718, %v708, 2102212464
    %v721 = vsel %vm717, %v705, %v720
    %v722 = vsel %vm716, %v719, %v721
    %v723 = vsel %vm715, %v702, %v705
    %v724 = vsel %vm718, %v711, 920167782
    %v725 = vsel %vm717, %v708, %v724
    %v726 = vsel %vm716, %v723, %v725
    %v727 = vsel %vm715, %v705, %v708
    %v728 = vsel %vm718, %v714, 1326507024
    %v729 = vsel %vm717, %v711, %v728
    %v730 = vsel %vm716, %v727, %v729
    %v731 = vshll.u32 %v691, 8
    %v732 = vand.u32 %v731, 65535
    %v733 = vshrl.u32 %v731, 16
    %v734 = vand.u32 %v730, 65535
    %v735 = vshrl.u32 %v730, 16
    %v736 = vmul.u32 %v732, %v734
    %v737 = vmul.u32 %v732, %v735
    %v738 = vmul.u32 %v733, %v734
    %v739 = vmul.u32 %v733, %v735
    %v740 = vshll.u32 %v737, 16
    %v741 = vshrl.u32 %v737, 16
    %v742 = vshll.u32 %v738, 16
    %v743 = vshrl.u32 %v738, 16
    %vm744 = vc.u32 %v736, %v740
    %v745 = vsel %vm744, 1, 0
    %v746 = vadd.s32 %v736, %v740
    %v747 = vadd.s32 %v739, %v745
    %vm748 = vc.u32 %v746, %v742
    %v749 = vsel %vm748, 1, 0
    %v750 = vadd.s32 %v746, %v742
    %v751 = vadd.s32 %v747, %v749
    %v752 = vadd.s32 %v751, %v741
    %v753 = vadd.s32 %v752, %v743
    %v754 = vand.u32 %v731, 65535
    %v755 = vshrl.u32 %v731, 16
    %v756 = vand.u32 %v726, 65535
    %v757 = vshrl.u32 %v726, 16
    %v758 = vmul.u32 %v754, %v756
    %v759 = vmul.u32 %v754, %v757
    %v760 = vmul.u32 %v755, %v756
    %v761 = vmul.u32 %v755, %v757
    %v762 = vshll.u32 %v759, 16
    %v763 = vshrl.u32 %v759, 16
    %v764 = vshll.u32 %v760, 16
    %v765 = vshrl.u32 %v760, 16
    %vm766 = vc.u32 %v758, %v762
    %v767 = vsel %vm766, 1, 0
    %v768 = vadd.s32 %v758, %v762
    %v769 = vadd.s32 %v761, %v767
    %vm770 = vc.u32 %v768, %v764
    %v771 = vsel %vm770, 1, 0
    %v772 = vadd.s32 %v768, %v764
    %v773 = vadd.s32 %v769, %v771
    %v774 = vadd.s32 %v773, %v763
    %v775 = vadd.s32 %v774, %v765
    %v776 = vmul.u32 %v731, %v722
    %v777 = vadd.s32 %v753, %v772
    %vm778 = vc.u32 %v753, %v772
    %v779 = vadd.s32 %v775, 1
    %v780 = vsel %vm778, %v779, %v775
    %v781 = vadd.s32 %v776, %v780
    %v782 = vadd.s32 %v781, 536870912
    %v783 = vshrl.u32 %v782, 30
    %v784 = vshll.u32 %v783, 30
    %v785 = vsub.s32 %v781, %v784
    %vm786 = vcmp.lt.s32.totalorder %v785, 0
    %v787 = vsub.s32 0, %v785
    %v788 = vsel %vm786, %v787, %v785
    %v789 = vclz %v788
    %v790 = vsub.s32 %v789, 2
    %vm791 = vcmp.gt.s32.totalorder 0, %v790
    %v792 = vsel %vm791, 0, %v790
    %v793 = vsub.s32 32, %v792
    %v794 = vshll.u32 %v785, %v792
    %v795 = vshrl.u32 %v777, %v793
    %v796 = vor.u32 %v794, %v795
    %v797 = vsub.s32 4294967266, %v792
    %v798 = vadd.s32 %v797, 127
    %v799 = vshll.u32 %v798, 23
    %v800 = vor.u32 4788187, %v799
    %v801 = vand.u32 2147483647, %v800
    %v803 = vcvt.s32.f32 %v796
    %v804 = vmul.f32 %v803, %v801
    %v805 = vxor.u32 %v804, 2147483648
    %v806 = vsel %vm685, %v805, %v804
    %v807 = vsub.s32 4, %v783
    %v808 = vsel %vm685, %v807, %v783
    %v809 = vsel %vm684, %v59, %v806
    %v810 = vsel %vm684, 0, %v808
    %v811 = vmul.f32 %v809, %v809
    %v812 = vmul.f32 %v811, -0.001358992
    %v813 = vadd.f32 %v812, 0.041655596
    %v814 = vmul.f32 %v811, %v813
    %v815 = vadd.f32 %v814, -0.4999988
    %v816 = vmul.f32 %v811, %v815
    %v817 = vadd.f32 1.0, %v816
    %v818 = vmul.f32 %v809, %v809
    %v819 = vmul.f32 %v818, -0.00019511016
    %v820 = vadd.f32 %v819, 0.008332121
    %v821 = vmul.f32 %v818, %v820
    %v822 = vadd.f32 %v821, -0.16666654
    %v823 = vmul.f32 %v818, %v822
    %v824 = vadd.f32 %v823, 1.0
    %v825 = vmul.f32 %v824, %v809
    %vm826 = vweird.f32 %v59
    %v827 = vadd.s32 %v810, 3
    %v828 = vand.u32 %v827, 3
    %vm829 = vcmp.lt.s32.totalorder %v828, 2
    %vm830 = vcmp.eq.s32.totalorder %v828, 0
    %v831 = vxor.u32 %v825, 2147483648
    %v832 = vsel %vm830, %v817, %v831
    %vm833 = vcmp.eq.s32.totalorder %v828, 2
    %v834 = vxor.u32 %v817, 2147483648
    %v835 = vsel %vm833, %v834, %v825
    %v836 = vsel %vm829, %v832, %v835
    %v837 = vsel %vm826, nan, %v836
    %v838 = vand.u32 2147483647, %v60
    %vm839 = vcmp.le.f32.partialorder %v838, 0.7853982
    %vm840 = vcmp.lt.s32.totalorder %v60, 0
    %v841 = vand.u32 %v60, 2139095040
    %v842 = vshrl.u32 %v841, 23
    %v843 = vsub.s32 %v842, 127
    %v844 = vand.u32 2147483647, %v60
    %v845 = vand.u32 %v844, 8388607
    %v846 = vor.u32 %v845, 8388608
    %v847 = vsub.s32 0, %v846
    %v848 = vadd.s32 %v843, 1
    %vm849 = vcmp.gt.s32.totalorder %v848, 0
    %v850 = vsel %vm849, %v848, 0
    %v851 = vshrl.u32 %v850, 5
    %v852 = vand.u32 %v850, 31
    %v853 = vsub.s32 32, %v852
    %v854 = vshrl.u32 683565275, %v853
    %v855 = vshll.u32 683565275, %v852
    %v856 = vshrl.u32 2475754826, %v853
    %v857 = vor.u32 %v855, %v856
    %v858 = vshll.u32 2475754826, %v852
    %v859 = vshrl.u32 2131351028, %v853
    %v860 = vor.u32 %v858, %v859
    %v861 = vshll.u32 2131351028, %v852
    %v862 = vshrl.u32 2102212464, %v853
    %v863 = vor.u32 %v861, %v862
    %v864 = vshll.u32 2102212464, %v852
    %v865 = vshrl.u32 920167782, %v853
    %v866 = vor.u32 %v864, %v865
    %v867 = vshll.u32 920167782, %v852
    %v868 = vshrl.u32 1326507024, %v853
    %v869 = vor.u32 %v867, %v868
    %vm870 = vcmp.lt.s32.totalorder %v851, 1
    %vm871 = vcmp.lt.s32.totalorder %v851, 2
    %vm872 = vcmp.lt.s32.totalorder %v851, 3
    %vm873 = vcmp.lt.s32.totalorder %v851, 4
    %v874 = vsel %vm870, %v854, %v857
    %v875 = vsel %vm873, %v863, 2102212464
    %v876 = vsel %vm872, %v860, %v875
    %v877 = vsel %vm871, %v874, %v876
    %v878 = vsel %vm870, %v857, %v860
    %v879 = vsel %vm873, %v866, 920167782
    %v880 = vsel %vm872, %v863, %v879
    %v881 = vsel %vm871, %v878, %v880
    %v882 = vsel %vm870, %v860, %v863
    %v883 = vsel %vm873, %v869, 1326507024
    %v884 = vsel %vm872, %v866, %v883
    %v885 = vsel %vm871, %v882, %v884
    %v886 = vshll.u32 %v846, 8
    %v887 = vand.u32 %v886, 65535
    %v888 = vshrl.u32 %v886, 16
    %v889 = vand.u32 %v885, 65535
    %v890 = vshrl.u32 %v885, 16
    %v891 = vmul.u32 %v887, %v889
    %v892 = vmul.u32 %v887, %v890
    %v893 = vmul.u32 %v888, %v889
    %v894 = vmul.u32 %v888, %v890
    %v895 = vshll.u32 %v892, 16
    %v896 = vshrl.u32 %v892, 16
    %v897 = vshll.u32 %v893, 16
    %v898 = vshrl.u32 %v893, 16
    %vm899 = vc.u32 %v891, %v895
    %v900 = vsel %vm899, 1, 0
    %v901 = vadd.s32 %v891, %v895
    %v902 = vadd.s32 %v894, %v900
    %vm903 = vc.u32 %v901, %v897
    %v904 = vsel %vm903, 1, 0
    %v905 = vadd.s32 %v901, %v897
    %v906 = vadd.s32 %v902, %v904
    %v907 = vadd.s32 %v906, %v896
    %v908 = vadd.s32 %v907, %v898
    %v909 = vand.u32 %v886, 65535
    %v910 = vshrl.u32 %v886, 16
    %v911 = vand.u32 %v881, 65535
    %v912 = vshrl.u32 %v881, 16
    %v913 = vmul.u32 %v909, %v911
    %v914 = vmul.u32 %v909, %v912
    %v915 = vmul.u32 %v910, %v911
    %v916 = vmul.u32 %v910, %v912
    %v917 = vshll.u32 %v914, 16
    %v918 = vshrl.u32 %v914, 16
    %v919 = vshll.u32 %v915, 16
    %v920 = vshrl.u32 %v915, 16
    %vm921 = vc.u32 %v913, %v917
    %v922 = vsel %vm921, 1, 0
    %v923 = vadd.s32 %v913, %v917
    %v924 = vadd.s32 %v916, %v922
    %vm925 = vc.u32 %v923, %v919
    %v926 = vsel %vm925, 1, 0
    %v927 = vadd.s32 %v923, %v919
    %v928 = vadd.s32 %v924, %v926
    %v929 = vadd.s32 %v928, %v918
    %v930 = vadd.s32 %v929, %v920
    %v931 = vmul.u32 %v886, %v877
    %v932 = vadd.s32 %v908, %v927
    %vm933 = vc.u32 %v908, %v927
    %v934 = vadd.s32 %v930, 1
    %v935 = vsel %vm933, %v934, %v930
    %v936 = vadd.s32 %v931, %v935
    %v937 = vadd.s32 %v936, 536870912
    %v938 = vshrl.u32 %v937, 30
    %v939 = vshll.u32 %v938, 30
    %v940 = vsub.s32 %v936, %v939
    %vm941 = vcmp.lt.s32.totalorder %v940, 0
    %v942 = vsub.s32 0, %v940
    %v943 = vsel %vm941, %v942, %v940
    %v944 = vclz %v943
    %v945 = vsub.s32 %v944, 2
    %vm946 = vcmp.gt.s32.totalorder 0, %v945
    %v947 = vsel %vm946, 0, %v945
    %v948 = vsub.s32 32, %v947
    %v949 = vshll.u32 %v940, %v947
    %v950 = vshrl.u32 %v932, %v948
    %v951 = vor.u32 %v949, %v950
    %v952 = vsub.s32 4294967266, %v947
    %v953 = vadd.s32 %v952, 127
    %v954 = vshll.u32 %v953, 23
    %v955 = vor.u32 4788187, %v954
    %v956 = vand.u32 2147483647, %v955
    %v958 = vcvt.s32.f32 %v951
    %v959 = vmul.f32 %v958, %v956
    %v960 = vxor.u32 %v959, 2147483648
    %v961 = vsel %vm840, %v960, %v959
    %v962 = vsub.s32 4, %v938
    %v963 = vsel %vm840, %v962, %v938
    %v964 = vsel %vm839, %v60, %v961
    %v965 = vsel %vm839, 0, %v963
    %v966 = vmul.f32 %v964, %v964
    %v967 = vmul.f32 %v966, -0.001358992
    %v968 = vadd.f32 %v967, 0.041655596
    %v969 = vmul.f32 %v966, %v968
    %v970 = vadd.f32 %v969, -0.4999988
    %v971 = vmul.f32 %v966, %v970
    %v972 = vadd.f32 1.0, %v971
    %v973 = vmul.f32 %v964, %v964
    %v974 = vmul.f32 %v973, -0.00019511016
    %v975 = vadd.f32 %v974, 0.008332121
    %v976 = vmul.f32 %v973, %v975
    %v977 = vadd.f32 %v976, -0.16666654
    %v978 = vmul.f32 %v973, %v977
    %v979 = vadd.f32 %v978, 1.0
    %v980 = vmul.f32 %v979, %v964
    %vm981 = vweird.f32 %v60
    %v982 = vadd.s32 %v965, 3
    %v983 = vand.u32 %v982, 3
    %vm984 = vcmp.lt.s32.totalorder %v983, 2
    %vm985 = vcmp.eq.s32.totalorder %v983, 0
    %v986 = vxor.u32 %v980, 2147483648
    %v987 = vsel %vm985, %v972, %v986
    %vm988 = vcmp.eq.s32.totalorder %v983, 2
    %v989 = vxor.u32 %v972, 2147483648
    %v990 = vsel %vm988, %v989, %v980
    %v991 = vsel %vm984, %v987, %v990
    %v992 = vsel %vm981, nan, %v991
    %v993 = vand.u32 2147483647, %v61
    %vm994 = vcmp.le.f32.partialorder %v993, 0.7853982
    %vm995 = vcmp.lt.s32.totalorder %v61, 0
    %v996 = vand.u32 %v61, 2139095040
    %v997 = vshrl.u32 %v996, 23
    %v998 = vsub.s32 %v997, 127
    %v999 = vand.u32 2147483647, %v61
    %v1000 = vand.u32 %v999, 8388607
    %v1001 = vor.u32 %v1000, 8388608
    %v1002 = vsub.s32 0, %v1001
    %v1003 = vadd.s32 %v998, 1
    %vm1004 = vcmp.gt.s32.totalorder %v1003, 0
    %v1005 = vsel %vm1004, %v1003, 0
    %v1006 = vshrl.u32 %v1005, 5
    %v1007 = vand.u32 %v1005, 31
    %v1008 = vsub.s32 32, %v1007
    %v1009 = vshrl.u32 683565275, %v1008
    %v1010 = vshll.u32 683565275, %v1007
    %v1011 = vshrl.u32 2475754826, %v1008
    %v1012 = vor.u32 %v1010, %v1011
    %v1013 = vshll.u32 2475754826, %v1007
    %v1014 = vshrl.u32 2131351028, %v1008
    %v1015 = vor.u32 %v1013, %v1014
    %v1016 = vshll.u32 2131351028, %v1007
    %v1017 = vshrl.u32 2102212464, %v1008
    %v1018 = vor.u32 %v1016, %v1017
    %v1019 = vshll.u32 2102212464, %v1007
    %v1020 = vshrl.u32 920167782, %v1008
    %v1021 = vor.u32 %v1019, %v1020
    %v1022 = vshll.u32 920167782, %v1007
    %v1023 = vshrl.u32 1326507024, %v1008
    %v1024 = vor.u32 %v1022, %v1023
    %vm1025 = vcmp.lt.s32.totalorder %v1006, 1
    %vm1026 = vcmp.lt.s32.totalorder %v1006, 2
    %vm1027 = vcmp.lt.s32.totalorder %v1006, 3
    %vm1028 = vcmp.lt.s32.totalorder %v1006, 4
    %v1029 = vsel %vm1025, %v1009, %v1012
    %v1030 = vsel %vm1028, %v1018, 2102212464
    %v1031 = vsel %vm1027, %v1015, %v1030
    %v1032 = vsel %vm1026, %v1029, %v1031
    %v1033 = vsel %vm1025, %v1012, %v1015
    %v1034 = vsel %vm1028, %v1021, 920167782
    %v1035 = vsel %vm1027, %v1018, %v1034
    %v1036 = vsel %vm1026, %v1033, %v1035
    %v1037 = vsel %vm1025, %v1015, %v1018
    %v1038 = vsel %vm1028, %v1024, 1326507024
    %v1039 = vsel %vm1027, %v1021, %v1038
    %v1040 = vsel %vm1026, %v1037, %v1039
    %v1041 = vshll.u32 %v1001, 8
    %v1042 = vand.u32 %v1041, 65535
    %v1043 = vshrl.u32 %v1041, 16
    %v1044 = vand.u32 %v1040, 65535
    %v1045 = vshrl.u32 %v1040, 16
    %v1046 = vmul.u32 %v1042, %v1044
    %v1047 = vmul.u32 %v1042, %v1045
    %v1048 = vmul.u32 %v1043, %v1044
    %v1049 = vmul.u32 %v1043, %v1045
    %v1050 = vshll.u32 %v1047, 16
    %v1051 = vshrl.u32 %v1047, 16
    %v1052 = vshll.u32 %v1048, 16
    %v1053 = vshrl.u32 %v1048, 16
    %vm1054 = vc.u32 %v1046, %v1050
    %v1055 = vsel %vm1054, 1, 0
    %v1056 = vadd.s32 %v1046, %v1050
    %v1057 = vadd.s32 %v1049, %v1055
    %vm1058 = vc.u32 %v1056, %v1052
    %v1059 = vsel %vm1058, 1, 0
    %v1060 = vadd.s32 %v1056, %v1052
    %v1061 = vadd.s32 %v1057, %v1059
    %v1062 = vadd.s32 %v1061, %v1051
    %v1063 = vadd.s32 %v1062, %v1053
    %v1064 = vand.u32 %v1041, 65535
    %v1065 = vshrl.u32 %v1041, 16
    %v1066 = vand.u32 %v1036, 65535
    %v1067 = vshrl.u32 %v1036, 16
    %v1068 = vmul.u32 %v1064, %v1066
    %v1069 = vmul.u32 %v1064, %v1067
    %v1070 = vmul.u32 %v1065, %v1066
    %v1071 = vmul.u32 %v1065, %v1067
    %v1072 = vshll.u32 %v1069, 16
    %v1073 = vshrl.u32 %v1069, 16
    %v1074 = vshll.u32 %v1070, 16
    %v1075 = vshrl.u32 %v1070, 16
    %vm1076 = vc.u32 %v1068, %v1072
    %v1077 = vsel %vm1076, 1, 0
    %v1078 = vadd.s32 %v1068, %v1072
    %v1079 = vadd.s32 %v1071, %v1077
    %vm1080 = vc.u32 %v1078, %v1074
    %v1081 = vsel %vm1080, 1, 0
    %v1082 = vadd.s32 %v1078, %v1074
    %v1083 = vadd.s32 %v1079, %v1081
    %v1084 = vadd.s32 %v1083, %v1073
    %v1085 = vadd.s32 %v1084, %v1075
    %v1086 = vmul.u32 %v1041, %v1032
    %v1087 = vadd.s32 %v1063, %v1082
    %vm1088 = vc.u32 %v1063, %v1082
    %v1089 = vadd.s32 %v1085, 1
    %v1090 = vsel %vm1088, %v1089, %v1085
    %v1091 = vadd.s32 %v1086, %v1090
    %v1092 = vadd.s32 %v1091, 536870912
    %v1093 = vshrl.u32 %v1092, 30
    %v1094 = vshll.u32 %v1093, 30
    %v1095 = vsub.s32 %v1091, %v1094
    %vm1096 = vcmp.lt.s32.totalorder %v1095, 0
    %v1097 = vsub.s32 0, %v1095
    %v1098 = vsel %vm1096, %v1097, %v1095
    %v1099 = vclz %v1098
    %v1100 = vsub.s32 %v1099, 2
    %vm1101 = vcmp.gt.s32.totalorder 0, %v1100
    %v1102 = vsel %vm1101, 0, %v1100
    %v1103 = vsub.s32 32, %v1102
    %v1104 = vshll.u32 %v1095, %v1102
    %v1105 = vshrl.u32 %v1087, %v1103
    %v1106 = vor.u32 %v1104, %v1105
    %v1107 = vsub.s32 4294967266, %v1102
    %v1108 = vadd.s32 %v1107, 127
    %v1109 = vshll.u32 %v1108, 23
    %v1110 = vor.u32 4788187, %v1109
    %v1111 = vand.u32 2147483647, %v1110
    %v1113 = vcvt.s32.f32 %v1106
    %v1114 = vmul.f32 %v1113, %v1111
    %v1115 = vxor.u32 %v1114, 2147483648
    %v1116 = vsel %vm995, %v1115, %v1114
    %v1117 = vsub.s32 4, %v1093
    %v1118 = vsel %vm995, %v1117, %v1093
    %v1119 = vsel %vm994, %v61, %v1116
    %v1120 = vsel %vm994, 0, %v1118
    %v1121 = vmul.f32 %v1119, %v1119
    %v1122 = vmul.f32 %v1121, -0.001358992
    %v1123 = vadd.f32 %v1122, 0.041655596
    %v1124 = vmul.f32 %v1121, %v1123
    %v1125 = vadd.f32 %v1124, -0.4999988
    %v1126 = vmul.f32 %v1121, %v1125
    %v1127 = vadd.f32 1.0, %v1126
    %v1128 = vmul.f32 %v1119, %v1119
    %v1129 = vmul.f32 %v1128, -0.00019511016
    %v1130 = vadd.f32 %v1129, 0.008332121
    %v1131 = vmul.f32 %v1128, %v1130
    %v1132 = vadd.f32 %v1131, -0.16666654
    %v1133 = vmul.f32 %v1128, %v1132
    %v1134 = vadd.f32 %v1133, 1.0
    %v1135 = vmul.f32 %v1134, %v1119
    %vm1136 = vweird.f32 %v61
    %v1137 = vadd.s32 %v1120, 3
    %v1138 = vand.u32 %v1137, 3
    %vm1139 = vcmp.lt.s32.totalorder %v1138, 2
    %vm1140 = vcmp.eq.s32.totalorder %v1138, 0
    %v1141 = vxor.u32 %v1135, 2147483648
    %v1142 = vsel %vm1140, %v1127, %v1141
    %vm1143 = vcmp.eq.s32.totalorder %v1138, 2
    %v1144 = vxor.u32 %v1127, 2147483648
    %v1145 = vsel %vm1143, %v1144, %v1135
    %v1146 = vsel %vm1139, %v1142, %v1145
    %v1147 = vsel %vm1136, nan, %v1146
    %v1148 = vand.u32 2147483647, %v62
    %vm1149 = vcmp.le.f32.partialorder %v1148, 0.7853982
    %vm1150 = vcmp.lt.s32.totalorder %v62, 0
    %v1151 = vand.u32 %v62, 2139095040
    %v1152 = vshrl.u32 %v1151, 23
    %v1153 = vsub.s32 %v1152, 127
    %v1154 = vand.u32 2147483647, %v62
    %v1155 = vand.u32 %v1154, 8388607
    %v1156 = vor.u32 %v1155, 8388608
    %v1157 = vsub.s32 0, %v1156
    %v1158 = vadd.s32 %v1153, 1
    %vm1159 = vcmp.gt.s32.totalorder %v1158, 0
    %v1160 = vsel %vm1159, %v1158, 0
    %v1161 = vshrl.u32 %v1160, 5
    %v1162 = vand.u32 %v1160, 31
    %v1163 = vsub.s32 32, %v1162
    %v1164 = vshrl.u32 683565275, %v1163
    %v1165 = vshll.u32 683565275, %v1162
    %v1166 = vshrl.u32 2475754826, %v1163
    %v1167 = vor.u32 %v1165, %v1166
    %v1168 = vshll.u32 2475754826, %v1162
    %v1169 = vshrl.u32 2131351028, %v1163
    %v1170 = vor.u32 %v1168, %v1169
    %v1171 = vshll.u32 2131351028, %v1162
    %v1172 = vshrl.u32 2102212464, %v1163
    %v1173 = vor.u32 %v1171, %v1172
    %v1174 = vshll.u32 2102212464, %v1162
    %v1175 = vshrl.u32 920167782, %v1163
    %v1176 = vor.u32 %v1174, %v1175
    %v1177 = vshll.u32 920167782, %v1162
    %v1178 = vshrl.u32 1326507024, %v1163
    %v1179 = vor.u32 %v1177, %v1178
    %vm1180 = vcmp.lt.s32.totalorder %v1161, 1
    %vm1181 = vcmp.lt.s32.totalorder %v1161, 2
    %vm1182 = vcmp.lt.s32.totalorder %v1161, 3
    %vm1183 = vcmp.lt.s32.totalorder %v1161, 4
    %v1184 = vsel %vm1180, %v1164, %v1167
    %v1185 = vsel %vm1183, %v1173, 2102212464
    %v1186 = vsel %vm1182, %v1170, %v1185
    %v1187 = vsel %vm1181, %v1184, %v1186
    %v1188 = vsel %vm1180, %v1167, %v1170
    %v1189 = vsel %vm1183, %v1176, 920167782
    %v1190 = vsel %vm1182, %v1173, %v1189
    %v1191 = vsel %vm1181, %v1188, %v1190
    %v1192 = vsel %vm1180, %v1170, %v1173
    %v1193 = vsel %vm1183, %v1179, 1326507024
    %v1194 = vsel %vm1182, %v1176, %v1193
    %v1195 = vsel %vm1181, %v1192, %v1194
    %v1196 = vshll.u32 %v1156, 8
    %v1197 = vand.u32 %v1196, 65535
    %v1198 = vshrl.u32 %v1196, 16
    %v1199 = vand.u32 %v1195, 65535
    %v1200 = vshrl.u32 %v1195, 16
    %v1201 = vmul.u32 %v1197, %v1199
    %v1202 = vmul.u32 %v1197, %v1200
    %v1203 = vmul.u32 %v1198, %v1199
    %v1204 = vmul.u32 %v1198, %v1200
    %v1205 = vshll.u32 %v1202, 16
    %v1206 = vshrl.u32 %v1202, 16
    %v1207 = vshll.u32 %v1203, 16
    %v1208 = vshrl.u32 %v1203, 16
    %vm1209 = vc.u32 %v1201, %v1205
    %v1210 = vsel %vm1209, 1, 0
    %v1211 = vadd.s32 %v1201, %v1205
    %v1212 = vadd.s32 %v1204, %v1210
    %vm1213 = vc.u32 %v1211, %v1207
    %v1214 = vsel %vm1213, 1, 0
    %v1215 = vadd.s32 %v1211, %v1207
    %v1216 = vadd.s32 %v1212, %v1214
    %v1217 = vadd.s32 %v1216, %v1206
    %v1218 = vadd.s32 %v1217, %v1208
    %v1219 = vand.u32 %v1196, 65535
    %v1220 = vshrl.u32 %v1196, 16
    %v1221 = vand.u32 %v1191, 65535
    %v1222 = vshrl.u32 %v1191, 16
    %v1223 = vmul.u32 %v1219, %v1221
    %v1224 = vmul.u32 %v1219, %v1222
    %v1225 = vmul.u32 %v1220, %v1221
    %v1226 = vmul.u32 %v1220, %v1222
    %v1227 = vshll.u32 %v1224, 16
    %v1228 = vshrl.u32 %v1224, 16
    %v1229 = vshll.u32 %v1225, 16
    %v1230 = vshrl.u32 %v1225, 16
    %vm1231 = vc.u32 %v1223, %v1227
    %v1232 = vsel %vm1231, 1, 0
    %v1233 = vadd.s32 %v1223, %v1227
    %v1234 = vadd.s32 %v1226, %v1232
    %vm1235 = vc.u32 %v1233, %v1229
    %v1236 = vsel %vm1235, 1, 0
    %v1237 = vadd.s32 %v1233, %v1229
    %v1238 = vadd.s32 %v1234, %v1236
    %v1239 = vadd.s32 %v1238, %v1228
    %v1240 = vadd.s32 %v1239, %v1230
    %v1241 = vmul.u32 %v1196, %v1187
    %v1242 = vadd.s32 %v1218, %v1237
    %vm1243 = vc.u32 %v1218, %v1237
    %v1244 = vadd.s32 %v1240, 1
    %v1245 = vsel %vm1243, %v1244, %v1240
    %v1246 = vadd.s32 %v1241, %v1245
    %v1247 = vadd.s32 %v1246, 536870912
    %v1248 = vshrl.u32 %v1247, 30
    %v1249 = vshll.u32 %v1248, 30
    %v1250 = vsub.s32 %v1246, %v1249
    %vm1251 = vcmp.lt.s32.totalorder %v1250, 0
    %v1252 = vsub.s32 0, %v1250
    %v1253 = vsel %vm1251, %v1252, %v1250
    %v1254 = vclz %v1253
    %v1255 = vsub.s32 %v1254, 2
    %vm1256 = vcmp.gt.s32.totalorder 0, %v1255
    %v1257 = vsel %vm1256, 0, %v1255
    %v1258 = vsub.s32 32, %v1257
    %v1259 = vshll.u32 %v1250, %v1257
    %v1260 = vshrl.u32 %v1242, %v1258
    %v1261 = vor.u32 %v1259, %v1260
    %v1262 = vsub.s32 4294967266, %v1257
    %v1263 = vadd.s32 %v1262, 127
    %v1264 = vshll.u32 %v1263, 23
    %v1265 = vor.u32 4788187, %v1264
    %v1266 = vand.u32 2147483647, %v1265
    %v1268 = vcvt.s32.f32 %v1261
    %v1269 = vmul.f32 %v1268, %v1266
    %v1270 = vxor.u32 %v1269, 2147483648
    %v1271 = vsel %vm1150, %v1270, %v1269
    %v1272 = vsub.s32 4, %v1248
    %v1273 = vsel %vm1150, %v1272, %v1248
    %v1274 = vsel %vm1149, %v62, %v1271
    %v1275 = vsel %vm1149, 0, %v1273
    %v1276 = vmul.f32 %v1274, %v1274
    %v1277 = vmul.f32 %v1276, -0.001358992
    %v1278 = vadd.f32 %v1277, 0.041655596
    %v1279 = vmul.f32 %v1276, %v1278
    %v1280 = vadd.f32 %v1279, -0.4999988
    %v1281 = vmul.f32 %v1276, %v1280
    %v1282 = vadd.f32 1.0, %v1281
    %v1283 = vmul.f32 %v1274, %v1274
    %v1284 = vmul.f32 %v1283, -0.00019511016
    %v1285 = vadd.f32 %v1284, 0.008332121
    %v1286 = vmul.f32 %v1283, %v1285
    %v1287 = vadd.f32 %v1286, -0.16666654
    %v1288 = vmul.f32 %v1283, %v1287
    %v1289 = vadd.f32 %v1288, 1.0
    %v1290 = vmul.f32 %v1289, %v1274
    %vm1291 = vweird.f32 %v62
    %v1292 = vadd.s32 %v1275, 3
    %v1293 = vand.u32 %v1292, 3
    %vm1294 = vcmp.lt.s32.totalorder %v1293, 2
    %vm1295 = vcmp.eq.s32.totalorder %v1293, 0
    %v1296 = vxor.u32 %v1290, 2147483648
    %v1297 = vsel %vm1295, %v1282, %v1296
    %vm1298 = vcmp.eq.s32.totalorder %v1293, 2
    %v1299 = vxor.u32 %v1282, 2147483648
    %v1300 = vsel %vm1298, %v1299, %v1290
    %v1301 = vsel %vm1294, %v1297, %v1300
    %v1302 = vsel %vm1291, nan, %v1301
    %vm1303 = vcmask 261120
    %1304 = vst.msk [vmem:[%s1] sm:$0xff] %vm1303, %v217
    %1305 = vst.msk [vmem:[%s1 + $0x8] sm:$0xff] %vm1303, %v372
    %1306 = vst.msk [vmem:[%s1 + $0x10] sm:$0xff] %vm1303, %v527
    %1307 = vst.msk [vmem:[%s1 + $0x18] sm:$0xff] %vm1303, %v682
    %1308 = vst.msk [vmem:[%s1 + $0x20] sm:$0xff] %vm1303, %v837
    %1309 = vst.msk [vmem:[%s1 + $0x28] sm:$0xff] %vm1303, %v992
    %1310 = vst.msk [vmem:[%s1 + $0x30] sm:$0xff] %vm1303, %v1147
    %1311 = vst.msk [vmem:[%s1 + $0x38] sm:$0xff] %vm1303, %v1302
    %v1312 = vand.u32 2147483647, %v55
    %vm1313 = vcmp.le.f32.partialorder %v1312, 0.7853982
    %vm1314 = vcmp.lt.s32.totalorder %v55, 0
    %v1315 = vand.u32 %v55, 2139095040
    %v1316 = vshrl.u32 %v1315, 23
    %v1317 = vsub.s32 %v1316, 127
    %v1318 = vand.u32 2147483647, %v55
    %v1319 = vand.u32 %v1318, 8388607
    %v1320 = vor.u32 %v1319, 8388608
    %v1321 = vsub.s32 0, %v1320
    %v1322 = vadd.s32 %v1317, 1
    %vm1323 = vcmp.gt.s32.totalorder %v1322, 0
    %v1324 = vsel %vm1323, %v1322, 0
    %v1325 = vshrl.u32 %v1324, 5
    %v1326 = vand.u32 %v1324, 31
    %v1327 = vsub.s32 32, %v1326
    %v1328 = vshrl.u32 683565275, %v1327
    %v1329 = vshll.u32 683565275, %v1326
    %v1330 = vshrl.u32 2475754826, %v1327
    %v1331 = vor.u32 %v1329, %v1330
    %v1332 = vshll.u32 2475754826, %v1326
    %v1333 = vshrl.u32 2131351028, %v1327
    %v1334 = vor.u32 %v1332, %v1333
    %v1335 = vshll.u32 2131351028, %v1326
    %v1336 = vshrl.u32 2102212464, %v1327
    %v1337 = vor.u32 %v1335, %v1336
    %v1338 = vshll.u32 2102212464, %v1326
    %v1339 = vshrl.u32 920167782, %v1327
    %v1340 = vor.u32 %v1338, %v1339
    %v1341 = vshll.u32 920167782, %v1326
    %v1342 = vshrl.u32 1326507024, %v1327
    %v1343 = vor.u32 %v1341, %v1342
    %vm1344 = vcmp.lt.s32.totalorder %v1325, 1
    %vm1345 = vcmp.lt.s32.totalorder %v1325, 2
    %vm1346 = vcmp.lt.s32.totalorder %v1325, 3
    %vm1347 = vcmp.lt.s32.totalorder %v1325, 4
    %v1348 = vsel %vm1344, %v1328, %v1331
    %v1349 = vsel %vm1347, %v1337, 2102212464
    %v1350 = vsel %vm1346, %v1334, %v1349
    %v1351 = vsel %vm1345, %v1348, %v1350
    %v1352 = vsel %vm1344, %v1331, %v1334
    %v1353 = vsel %vm1347, %v1340, 920167782
    %v1354 = vsel %vm1346, %v1337, %v1353
    %v1355 = vsel %vm1345, %v1352, %v1354
    %v1356 = vsel %vm1344, %v1334, %v1337
    %v1357 = vsel %vm1347, %v1343, 1326507024
    %v1358 = vsel %vm1346, %v1340, %v1357
    %v1359 = vsel %vm1345, %v1356, %v1358
    %v1360 = vshll.u32 %v1320, 8
    %v1361 = vand.u32 %v1360, 65535
    %v1362 = vshrl.u32 %v1360, 16
    %v1363 = vand.u32 %v1359, 65535
    %v1364 = vshrl.u32 %v1359, 16
    %v1365 = vmul.u32 %v1361, %v1363
    %v1366 = vmul.u32 %v1361, %v1364
    %v1367 = vmul.u32 %v1362, %v1363
    %v1368 = vmul.u32 %v1362, %v1364
    %v1369 = vshll.u32 %v1366, 16
    %v1370 = vshrl.u32 %v1366, 16
    %v1371 = vshll.u32 %v1367, 16
    %v1372 = vshrl.u32 %v1367, 16
    %vm1373 = vc.u32 %v1365, %v1369
    %v1374 = vsel %vm1373, 1, 0
    %v1375 = vadd.s32 %v1365, %v1369
    %v1376 = vadd.s32 %v1368, %v1374
    %vm1377 = vc.u32 %v1375, %v1371
    %v1378 = vsel %vm1377, 1, 0
    %v1379 = vadd.s32 %v1375, %v1371
    %v1380 = vadd.s32 %v1376, %v1378
    %v1381 = vadd.s32 %v1380, %v1370
    %v1382 = vadd.s32 %v1381, %v1372
    %v1383 = vand.u32 %v1360, 65535
    %v1384 = vshrl.u32 %v1360, 16
    %v1385 = vand.u32 %v1355, 65535
    %v1386 = vshrl.u32 %v1355, 16
    %v1387 = vmul.u32 %v1383, %v1385
    %v1388 = vmul.u32 %v1383, %v1386
    %v1389 = vmul.u32 %v1384, %v1385
    %v1390 = vmul.u32 %v1384, %v1386
    %v1391 = vshll.u32 %v1388, 16
    %v1392 = vshrl.u32 %v1388, 16
    %v1393 = vshll.u32 %v1389, 16
    %v1394 = vshrl.u32 %v1389, 16
    %vm1395 = vc.u32 %v1387, %v1391
    %v1396 = vsel %vm1395, 1, 0
    %v1397 = vadd.s32 %v1387, %v1391
    %v1398 = vadd.s32 %v1390, %v1396
    %vm1399 = vc.u32 %v1397, %v1393
    %v1400 = vsel %vm1399, 1, 0
    %v1401 = vadd.s32 %v1397, %v1393
    %v1402 = vadd.s32 %v1398, %v1400
    %v1403 = vadd.s32 %v1402, %v1392
    %v1404 = vadd.s32 %v1403, %v1394
    %v1405 = vmul.u32 %v1360, %v1351
    %v1406 = vadd.s32 %v1382, %v1401
    %vm1407 = vc.u32 %v1382, %v1401
    %v1408 = vadd.s32 %v1404, 1
    %v1409 = vsel %vm1407, %v1408, %v1404
    %v1410 = vadd.s32 %v1405, %v1409
    %v1411 = vadd.s32 %v1410, 536870912
    %v1412 = vshrl.u32 %v1411, 30
    %v1413 = vshll.u32 %v1412, 30
    %v1414 = vsub.s32 %v1410, %v1413
    %vm1415 = vcmp.lt.s32.totalorder %v1414, 0
    %v1416 = vsub.s32 0, %v1414
    %v1417 = vsel %vm1415, %v1416, %v1414
    %v1418 = vclz %v1417
    %v1419 = vsub.s32 %v1418, 2
    %vm1420 = vcmp.gt.s32.totalorder 0, %v1419
    %v1421 = vsel %vm1420, 0, %v1419
    %v1422 = vsub.s32 32, %v1421
    %v1423 = vshll.u32 %v1414, %v1421
    %v1424 = vshrl.u32 %v1406, %v1422
    %v1425 = vor.u32 %v1423, %v1424
    %v1426 = vsub.s32 4294967266, %v1421
    %v1427 = vadd.s32 %v1426, 127
    %v1428 = vshll.u32 %v1427, 23
    %v1429 = vor.u32 4788187, %v1428
    %v1430 = vand.u32 2147483647, %v1429
    %v1432 = vcvt.s32.f32 %v1425
    %v1433 = vmul.f32 %v1432, %v1430
    %v1434 = vxor.u32 %v1433, 2147483648
    %v1435 = vsel %vm1314, %v1434, %v1433
    %v1436 = vsub.s32 4, %v1412
    %v1437 = vsel %vm1314, %v1436, %v1412
    %v1438 = vsel %vm1313, %v55, %v1435
    %v1439 = vsel %vm1313, 0, %v1437
    %v1440 = vmul.f32 %v1438, %v1438
    %v1441 = vmul.f32 %v1440, -0.001358992
    %v1442 = vadd.f32 %v1441, 0.041655596
    %v1443 = vmul.f32 %v1440, %v1442
    %v1444 = vadd.f32 %v1443, -0.4999988
    %v1445 = vmul.f32 %v1440, %v1444
    %v1446 = vadd.f32 1.0, %v1445
    %v1447 = vmul.f32 %v1438, %v1438
    %v1448 = vmul.f32 %v1447, -0.00019511016
    %v1449 = vadd.f32 %v1448, 0.008332121
    %v1450 = vmul.f32 %v1447, %v1449
    %v1451 = vadd.f32 %v1450, -0.16666654
    %v1452 = vmul.f32 %v1447, %v1451
    %v1453 = vadd.f32 %v1452, 1.0
    %v1454 = vmul.f32 %v1453, %v1438
    %vm1455 = vweird.f32 %v55
    %v1456 = vand.u32 %v1439, 3
    %vm1457 = vcmp.lt.s32.totalorder %v1456, 2
    %vm1458 = vcmp.eq.s32.totalorder %v1456, 0
    %v1459 = vxor.u32 %v1454, 2147483648
    %v1460 = vsel %vm1458, %v1446, %v1459
    %vm1461 = vcmp.eq.s32.totalorder %v1456, 2
    %v1462 = vxor.u32 %v1446, 2147483648
    %v1463 = vsel %vm1461, %v1462, %v1454
    %v1464 = vsel %vm1457, %v1460, %v1463
    %v1465 = vsel %vm1455, nan, %v1464
    %v1466 = vand.u32 2147483647, %v56
    %vm1467 = vcmp.le.f32.partialorder %v1466, 0.7853982
    %vm1468 = vcmp.lt.s32.totalorder %v56, 0
    %v1469 = vand.u32 %v56, 2139095040
    %v1470 = vshrl.u32 %v1469, 23
    %v1471 = vsub.s32 %v1470, 127
    %v1472 = vand.u32 2147483647, %v56
    %v1473 = vand.u32 %v1472, 8388607
    %v1474 = vor.u32 %v1473, 8388608
    %v1475 = vsub.s32 0, %v1474
    %v1476 = vadd.s32 %v1471, 1
    %vm1477 = vcmp.gt.s32.totalorder %v1476, 0
    %v1478 = vsel %vm1477, %v1476, 0
    %v1479 = vshrl.u32 %v1478, 5
    %v1480 = vand.u32 %v1478, 31
    %v1481 = vsub.s32 32, %v1480
    %v1482 = vshrl.u32 683565275, %v1481
    %v1483 = vshll.u32 683565275, %v1480
    %v1484 = vshrl.u32 2475754826, %v1481
    %v1485 = vor.u32 %v1483, %v1484
    %v1486 = vshll.u32 2475754826, %v1480
    %v1487 = vshrl.u32 2131351028, %v1481
    %v1488 = vor.u32 %v1486, %v1487
    %v1489 = vshll.u32 2131351028, %v1480
    %v1490 = vshrl.u32 2102212464, %v1481
    %v1491 = vor.u32 %v1489, %v1490
    %v1492 = vshll.u32 2102212464, %v1480
    %v1493 = vshrl.u32 920167782, %v1481
    %v1494 = vor.u32 %v1492, %v1493
    %v1495 = vshll.u32 920167782, %v1480
    %v1496 = vshrl.u32 1326507024, %v1481
    %v1497 = vor.u32 %v1495, %v1496
    %vm1498 = vcmp.lt.s32.totalorder %v1479, 1
    %vm1499 = vcmp.lt.s32.totalorder %v1479, 2
    %vm1500 = vcmp.lt.s32.totalorder %v1479, 3
    %vm1501 = vcmp.lt.s32.totalorder %v1479, 4
    %v1502 = vsel %vm1498, %v1482, %v1485
    %v1503 = vsel %vm1501, %v1491, 2102212464
    %v1504 = vsel %vm1500, %v1488, %v1503
    %v1505 = vsel %vm1499, %v1502, %v1504
    %v1506 = vsel %vm1498, %v1485, %v1488
    %v1507 = vsel %vm1501, %v1494, 920167782
    %v1508 = vsel %vm1500, %v1491, %v1507
    %v1509 = vsel %vm1499, %v1506, %v1508
    %v1510 = vsel %vm1498, %v1488, %v1491
    %v1511 = vsel %vm1501, %v1497, 1326507024
    %v1512 = vsel %vm1500, %v1494, %v1511
    %v1513 = vsel %vm1499, %v1510, %v1512
    %v1514 = vshll.u32 %v1474, 8
    %v1515 = vand.u32 %v1514, 65535
    %v1516 = vshrl.u32 %v1514, 16
    %v1517 = vand.u32 %v1513, 65535
    %v1518 = vshrl.u32 %v1513, 16
    %v1519 = vmul.u32 %v1515, %v1517
    %v1520 = vmul.u32 %v1515, %v1518
    %v1521 = vmul.u32 %v1516, %v1517
    %v1522 = vmul.u32 %v1516, %v1518
    %v1523 = vshll.u32 %v1520, 16
    %v1524 = vshrl.u32 %v1520, 16
    %v1525 = vshll.u32 %v1521, 16
    %v1526 = vshrl.u32 %v1521, 16
    %vm1527 = vc.u32 %v1519, %v1523
    %v1528 = vsel %vm1527, 1, 0
    %v1529 = vadd.s32 %v1519, %v1523
    %v1530 = vadd.s32 %v1522, %v1528
    %vm1531 = vc.u32 %v1529, %v1525
    %v1532 = vsel %vm1531, 1, 0
    %v1533 = vadd.s32 %v1529, %v1525
    %v1534 = vadd.s32 %v1530, %v1532
    %v1535 = vadd.s32 %v1534, %v1524
    %v1536 = vadd.s32 %v1535, %v1526
    %v1537 = vand.u32 %v1514, 65535
    %v1538 = vshrl.u32 %v1514, 16
    %v1539 = vand.u32 %v1509, 65535
    %v1540 = vshrl.u32 %v1509, 16
    %v1541 = vmul.u32 %v1537, %v1539
    %v1542 = vmul.u32 %v1537, %v1540
    %v1543 = vmul.u32 %v1538, %v1539
    %v1544 = vmul.u32 %v1538, %v1540
    %v1545 = vshll.u32 %v1542, 16
    %v1546 = vshrl.u32 %v1542, 16
    %v1547 = vshll.u32 %v1543, 16
    %v1548 = vshrl.u32 %v1543, 16
    %vm1549 = vc.u32 %v1541, %v1545
    %v1550 = vsel %vm1549, 1, 0
    %v1551 = vadd.s32 %v1541, %v1545
    %v1552 = vadd.s32 %v1544, %v1550
    %vm1553 = vc.u32 %v1551, %v1547
    %v1554 = vsel %vm1553, 1, 0
    %v1555 = vadd.s32 %v1551, %v1547
    %v1556 = vadd.s32 %v1552, %v1554
    %v1557 = vadd.s32 %v1556, %v1546
    %v1558 = vadd.s32 %v1557, %v1548
    %v1559 = vmul.u32 %v1514, %v1505
    %v1560 = vadd.s32 %v1536, %v1555
    %vm1561 = vc.u32 %v1536, %v1555
    %v1562 = vadd.s32 %v1558, 1
    %v1563 = vsel %vm1561, %v1562, %v1558
    %v1564 = vadd.s32 %v1559, %v1563
    %v1565 = vadd.s32 %v1564, 536870912
    %v1566 = vshrl.u32 %v1565, 30
    %v1567 = vshll.u32 %v1566, 30
    %v1568 = vsub.s32 %v1564, %v1567
    %vm1569 = vcmp.lt.s32.totalorder %v1568, 0
    %v1570 = vsub.s32 0, %v1568
    %v1571 = vsel %vm1569, %v1570, %v1568
    %v1572 = vclz %v1571
    %v1573 = vsub.s32 %v1572, 2
    %vm1574 = vcmp.gt.s32.totalorder 0, %v1573
    %v1575 = vsel %vm1574, 0, %v1573
    %v1576 = vsub.s32 32, %v1575
    %v1577 = vshll.u32 %v1568, %v1575
    %v1578 = vshrl.u32 %v1560, %v1576
    %v1579 = vor.u32 %v1577, %v1578
    %v1580 = vsub.s32 4294967266, %v1575
    %v1581 = vadd.s32 %v1580, 127
    %v1582 = vshll.u32 %v1581, 23
    %v1583 = vor.u32 4788187, %v1582
    %v1584 = vand.u32 2147483647, %v1583
    %v1586 = vcvt.s32.f32 %v1579
    %v1587 = vmul.f32 %v1586, %v1584
    %v1588 = vxor.u32 %v1587, 2147483648
    %v1589 = vsel %vm1468, %v1588, %v1587
    %v1590 = vsub.s32 4, %v1566
    %v1591 = vsel %vm1468, %v1590, %v1566
    %v1592 = vsel %vm1467, %v56, %v1589
    %v1593 = vsel %vm1467, 0, %v1591
    %v1594 = vmul.f32 %v1592, %v1592
    %v1595 = vmul.f32 %v1594, -0.001358992
    %v1596 = vadd.f32 %v1595, 0.041655596
    %v1597 = vmul.f32 %v1594, %v1596
    %v1598 = vadd.f32 %v1597, -0.4999988
    %v1599 = vmul.f32 %v1594, %v1598
    %v1600 = vadd.f32 1.0, %v1599
    %v1601 = vmul.f32 %v1592, %v1592
    %v1602 = vmul.f32 %v1601, -0.00019511016
    %v1603 = vadd.f32 %v1602, 0.008332121
    %v1604 = vmul.f32 %v1601, %v1603
    %v1605 = vadd.f32 %v1604, -0.16666654
    %v1606 = vmul.f32 %v1601, %v1605
    %v1607 = vadd.f32 %v1606, 1.0
    %v1608 = vmul.f32 %v1607, %v1592
    %vm1609 = vweird.f32 %v56
    %v1610 = vand.u32 %v1593, 3
    %vm1611 = vcmp.lt.s32.totalorder %v1610, 2
    %vm1612 = vcmp.eq.s32.totalorder %v1610, 0
    %v1613 = vxor.u32 %v1608, 2147483648
    %v1614 = vsel %vm1612, %v1600, %v1613
    %vm1615 = vcmp.eq.s32.totalorder %v1610, 2
    %v1616 = vxor.u32 %v1600, 2147483648
    %v1617 = vsel %vm1615, %v1616, %v1608
    %v1618 = vsel %vm1611, %v1614, %v1617
    %v1619 = vsel %vm1609, nan, %v1618
    %v1620 = vand.u32 2147483647, %v57
    %vm1621 = vcmp.le.f32.partialorder %v1620, 0.7853982
    %vm1622 = vcmp.lt.s32.totalorder %v57, 0
    %v1623 = vand.u32 %v57, 2139095040
    %v1624 = vshrl.u32 %v1623, 23
    %v1625 = vsub.s32 %v1624, 127
    %v1626 = vand.u32 2147483647, %v57
    %v1627 = vand.u32 %v1626, 8388607
    %v1628 = vor.u32 %v1627, 8388608
    %v1629 = vsub.s32 0, %v1628
    %v1630 = vadd.s32 %v1625, 1
    %vm1631 = vcmp.gt.s32.totalorder %v1630, 0
    %v1632 = vsel %vm1631, %v1630, 0
    %v1633 = vshrl.u32 %v1632, 5
    %v1634 = vand.u32 %v1632, 31
    %v1635 = vsub.s32 32, %v1634
    %v1636 = vshrl.u32 683565275, %v1635
    %v1637 = vshll.u32 683565275, %v1634
    %v1638 = vshrl.u32 2475754826, %v1635
    %v1639 = vor.u32 %v1637, %v1638
    %v1640 = vshll.u32 2475754826, %v1634
    %v1641 = vshrl.u32 2131351028, %v1635
    %v1642 = vor.u32 %v1640, %v1641
    %v1643 = vshll.u32 2131351028, %v1634
    %v1644 = vshrl.u32 2102212464, %v1635
    %v1645 = vor.u32 %v1643, %v1644
    %v1646 = vshll.u32 2102212464, %v1634
    %v1647 = vshrl.u32 920167782, %v1635
    %v1648 = vor.u32 %v1646, %v1647
    %v1649 = vshll.u32 920167782, %v1634
    %v1650 = vshrl.u32 1326507024, %v1635
    %v1651 = vor.u32 %v1649, %v1650
    %vm1652 = vcmp.lt.s32.totalorder %v1633, 1
    %vm1653 = vcmp.lt.s32.totalorder %v1633, 2
    %vm1654 = vcmp.lt.s32.totalorder %v1633, 3
    %vm1655 = vcmp.lt.s32.totalorder %v1633, 4
    %v1656 = vsel %vm1652, %v1636, %v1639
    %v1657 = vsel %vm1655, %v1645, 2102212464
    %v1658 = vsel %vm1654, %v1642, %v1657
    %v1659 = vsel %vm1653, %v1656, %v1658
    %v1660 = vsel %vm1652, %v1639, %v1642
    %v1661 = vsel %vm1655, %v1648, 920167782
    %v1662 = vsel %vm1654, %v1645, %v1661
    %v1663 = vsel %vm1653, %v1660, %v1662
    %v1664 = vsel %vm1652, %v1642, %v1645
    %v1665 = vsel %vm1655, %v1651, 1326507024
    %v1666 = vsel %vm1654, %v1648, %v1665
    %v1667 = vsel %vm1653, %v1664, %v1666
    %v1668 = vshll.u32 %v1628, 8
    %v1669 = vand.u32 %v1668, 65535
    %v1670 = vshrl.u32 %v1668, 16
    %v1671 = vand.u32 %v1667, 65535
    %v1672 = vshrl.u32 %v1667, 16
    %v1673 = vmul.u32 %v1669, %v1671
    %v1674 = vmul.u32 %v1669, %v1672
    %v1675 = vmul.u32 %v1670, %v1671
    %v1676 = vmul.u32 %v1670, %v1672
    %v1677 = vshll.u32 %v1674, 16
    %v1678 = vshrl.u32 %v1674, 16
    %v1679 = vshll.u32 %v1675, 16
    %v1680 = vshrl.u32 %v1675, 16
    %vm1681 = vc.u32 %v1673, %v1677
    %v1682 = vsel %vm1681, 1, 0
    %v1683 = vadd.s32 %v1673, %v1677
    %v1684 = vadd.s32 %v1676, %v1682
    %vm1685 = vc.u32 %v1683, %v1679
    %v1686 = vsel %vm1685, 1, 0
    %v1687 = vadd.s32 %v1683, %v1679
    %v1688 = vadd.s32 %v1684, %v1686
    %v1689 = vadd.s32 %v1688, %v1678
    %v1690 = vadd.s32 %v1689, %v1680
    %v1691 = vand.u32 %v1668, 65535
    %v1692 = vshrl.u32 %v1668, 16
    %v1693 = vand.u32 %v1663, 65535
    %v1694 = vshrl.u32 %v1663, 16
    %v1695 = vmul.u32 %v1691, %v1693
    %v1696 = vmul.u32 %v1691, %v1694
    %v1697 = vmul.u32 %v1692, %v1693
    %v1698 = vmul.u32 %v1692, %v1694
    %v1699 = vshll.u32 %v1696, 16
    %v1700 = vshrl.u32 %v1696, 16
    %v1701 = vshll.u32 %v1697, 16
    %v1702 = vshrl.u32 %v1697, 16
    %vm1703 = vc.u32 %v1695, %v1699
    %v1704 = vsel %vm1703, 1, 0
    %v1705 = vadd.s32 %v1695, %v1699
    %v1706 = vadd.s32 %v1698, %v1704
    %vm1707 = vc.u32 %v1705, %v1701
    %v1708 = vsel %vm1707, 1, 0
    %v1709 = vadd.s32 %v1705, %v1701
    %v1710 = vadd.s32 %v1706, %v1708
    %v1711 = vadd.s32 %v1710, %v1700
    %v1712 = vadd.s32 %v1711, %v1702
    %v1713 = vmul.u32 %v1668, %v1659
    %v1714 = vadd.s32 %v1690, %v1709
    %vm1715 = vc.u32 %v1690, %v1709
    %v1716 = vadd.s32 %v1712, 1
    %v1717 = vsel %vm1715, %v1716, %v1712
    %v1718 = vadd.s32 %v1713, %v1717
    %v1719 = vadd.s32 %v1718, 536870912
    %v1720 = vshrl.u32 %v1719, 30
    %v1721 = vshll.u32 %v1720, 30
    %v1722 = vsub.s32 %v1718, %v1721
    %vm1723 = vcmp.lt.s32.totalorder %v1722, 0
    %v1724 = vsub.s32 0, %v1722
    %v1725 = vsel %vm1723, %v1724, %v1722
    %v1726 = vclz %v1725
    %v1727 = vsub.s32 %v1726, 2
    %vm1728 = vcmp.gt.s32.totalorder 0, %v1727
    %v1729 = vsel %vm1728, 0, %v1727
    %v1730 = vsub.s32 32, %v1729
    %v1731 = vshll.u32 %v1722, %v1729
    %v1732 = vshrl.u32 %v1714, %v1730
    %v1733 = vor.u32 %v1731, %v1732
    %v1734 = vsub.s32 4294967266, %v1729
    %v1735 = vadd.s32 %v1734, 127
    %v1736 = vshll.u32 %v1735, 23
    %v1737 = vor.u32 4788187, %v1736
    %v1738 = vand.u32 2147483647, %v1737
    %v1740 = vcvt.s32.f32 %v1733
    %v1741 = vmul.f32 %v1740, %v1738
    %v1742 = vxor.u32 %v1741, 2147483648
    %v1743 = vsel %vm1622, %v1742, %v1741
    %v1744 = vsub.s32 4, %v1720
    %v1745 = vsel %vm1622, %v1744, %v1720
    %v1746 = vsel %vm1621, %v57, %v1743
    %v1747 = vsel %vm1621, 0, %v1745
    %v1748 = vmul.f32 %v1746, %v1746
    %v1749 = vmul.f32 %v1748, -0.001358992
    %v1750 = vadd.f32 %v1749, 0.041655596
    %v1751 = vmul.f32 %v1748, %v1750
    %v1752 = vadd.f32 %v1751, -0.4999988
    %v1753 = vmul.f32 %v1748, %v1752
    %v1754 = vadd.f32 1.0, %v1753
    %v1755 = vmul.f32 %v1746, %v1746
    %v1756 = vmul.f32 %v1755, -0.00019511016
    %v1757 = vadd.f32 %v1756, 0.008332121
    %v1758 = vmul.f32 %v1755, %v1757
    %v1759 = vadd.f32 %v1758, -0.16666654
    %v1760 = vmul.f32 %v1755, %v1759
    %v1761 = vadd.f32 %v1760, 1.0
    %v1762 = vmul.f32 %v1761, %v1746
    %vm1763 = vweird.f32 %v57
    %v1764 = vand.u32 %v1747, 3
    %vm1765 = vcmp.lt.s32.totalorder %v1764, 2
    %vm1766 = vcmp.eq.s32.totalorder %v1764, 0
    %v1767 = vxor.u32 %v1762, 2147483648
    %v1768 = vsel %vm1766, %v1754, %v1767
    %vm1769 = vcmp.eq.s32.totalorder %v1764, 2
    %v1770 = vxor.u32 %v1754, 2147483648
    %v1771 = vsel %vm1769, %v1770, %v1762
    %v1772 = vsel %vm1765, %v1768, %v1771
    %v1773 = vsel %vm1763, nan, %v1772
    %v1774 = vand.u32 2147483647, %v58
    %vm1775 = vcmp.le.f32.partialorder %v1774, 0.7853982
    %vm1776 = vcmp.lt.s32.totalorder %v58, 0
    %v1777 = vand.u32 %v58, 2139095040
    %v1778 = vshrl.u32 %v1777, 23
    %v1779 = vsub.s32 %v1778, 127
    %v1780 = vand.u32 2147483647, %v58
    %v1781 = vand.u32 %v1780, 8388607
    %v1782 = vor.u32 %v1781, 8388608
    %v1783 = vsub.s32 0, %v1782
    %v1784 = vadd.s32 %v1779, 1
    %vm1785 = vcmp.gt.s32.totalorder %v1784, 0
    %v1786 = vsel %vm1785, %v1784, 0
    %v1787 = vshrl.u32 %v1786, 5
    %v1788 = vand.u32 %v1786, 31
    %v1789 = vsub.s32 32, %v1788
    %v1790 = vshrl.u32 683565275, %v1789
    %v1791 = vshll.u32 683565275, %v1788
    %v1792 = vshrl.u32 2475754826, %v1789
    %v1793 = vor.u32 %v1791, %v1792
    %v1794 = vshll.u32 2475754826, %v1788
    %v1795 = vshrl.u32 2131351028, %v1789
    %v1796 = vor.u32 %v1794, %v1795
    %v1797 = vshll.u32 2131351028, %v1788
    %v1798 = vshrl.u32 2102212464, %v1789
    %v1799 = vor.u32 %v1797, %v1798
    %v1800 = vshll.u32 2102212464, %v1788
    %v1801 = vshrl.u32 920167782, %v1789
    %v1802 = vor.u32 %v1800, %v1801
    %v1803 = vshll.u32 920167782, %v1788
    %v1804 = vshrl.u32 1326507024, %v1789
    %v1805 = vor.u32 %v1803, %v1804
    %vm1806 = vcmp.lt.s32.totalorder %v1787, 1
    %vm1807 = vcmp.lt.s32.totalorder %v1787, 2
    %vm1808 = vcmp.lt.s32.totalorder %v1787, 3
    %vm1809 = vcmp.lt.s32.totalorder %v1787, 4
    %v1810 = vsel %vm1806, %v1790, %v1793
    %v1811 = vsel %vm1809, %v1799, 2102212464
    %v1812 = vsel %vm1808, %v1796, %v1811
    %v1813 = vsel %vm1807, %v1810, %v1812
    %v1814 = vsel %vm1806, %v1793, %v1796
    %v1815 = vsel %vm1809, %v1802, 920167782
    %v1816 = vsel %vm1808, %v1799, %v1815
    %v1817 = vsel %vm1807, %v1814, %v1816
    %v1818 = vsel %vm1806, %v1796, %v1799
    %v1819 = vsel %vm1809, %v1805, 1326507024
    %v1820 = vsel %vm1808, %v1802, %v1819
    %v1821 = vsel %vm1807, %v1818, %v1820
    %v1822 = vshll.u32 %v1782, 8
    %v1823 = vand.u32 %v1822, 65535
    %v1824 = vshrl.u32 %v1822, 16
    %v1825 = vand.u32 %v1821, 65535
    %v1826 = vshrl.u32 %v1821, 16
    %v1827 = vmul.u32 %v1823, %v1825
    %v1828 = vmul.u32 %v1823, %v1826
    %v1829 = vmul.u32 %v1824, %v1825
    %v1830 = vmul.u32 %v1824, %v1826
    %v1831 = vshll.u32 %v1828, 16
    %v1832 = vshrl.u32 %v1828, 16
    %v1833 = vshll.u32 %v1829, 16
    %v1834 = vshrl.u32 %v1829, 16
    %vm1835 = vc.u32 %v1827, %v1831
    %v1836 = vsel %vm1835, 1, 0
    %v1837 = vadd.s32 %v1827, %v1831
    %v1838 = vadd.s32 %v1830, %v1836
    %vm1839 = vc.u32 %v1837, %v1833
    %v1840 = vsel %vm1839, 1, 0
    %v1841 = vadd.s32 %v1837, %v1833
    %v1842 = vadd.s32 %v1838, %v1840
    %v1843 = vadd.s32 %v1842, %v1832
    %v1844 = vadd.s32 %v1843, %v1834
    %v1845 = vand.u32 %v1822, 65535
    %v1846 = vshrl.u32 %v1822, 16
    %v1847 = vand.u32 %v1817, 65535
    %v1848 = vshrl.u32 %v1817, 16
    %v1849 = vmul.u32 %v1845, %v1847
    %v1850 = vmul.u32 %v1845, %v1848
    %v1851 = vmul.u32 %v1846, %v1847
    %v1852 = vmul.u32 %v1846, %v1848
    %v1853 = vshll.u32 %v1850, 16
    %v1854 = vshrl.u32 %v1850, 16
    %v1855 = vshll.u32 %v1851, 16
    %v1856 = vshrl.u32 %v1851, 16
    %vm1857 = vc.u32 %v1849, %v1853
    %v1858 = vsel %vm1857, 1, 0
    %v1859 = vadd.s32 %v1849, %v1853
    %v1860 = vadd.s32 %v1852, %v1858
    %vm1861 = vc.u32 %v1859, %v1855
    %v1862 = vsel %vm1861, 1, 0
    %v1863 = vadd.s32 %v1859, %v1855
    %v1864 = vadd.s32 %v1860, %v1862
    %v1865 = vadd.s32 %v1864, %v1854
    %v1866 = vadd.s32 %v1865, %v1856
    %v1867 = vmul.u32 %v1822, %v1813
    %v1868 = vadd.s32 %v1844, %v1863
    %vm1869 = vc.u32 %v1844, %v1863
    %v1870 = vadd.s32 %v1866, 1
    %v1871 = vsel %vm1869, %v1870, %v1866
    %v1872 = vadd.s32 %v1867, %v1871
    %v1873 = vadd.s32 %v1872, 536870912
    %v1874 = vshrl.u32 %v1873, 30
    %v1875 = vshll.u32 %v1874, 30
    %v1876 = vsub.s32 %v1872, %v1875
    %vm1877 = vcmp.lt.s32.totalorder %v1876, 0
    %v1878 = vsub.s32 0, %v1876
    %v1879 = vsel %vm1877, %v1878, %v1876
    %v1880 = vclz %v1879
    %v1881 = vsub.s32 %v1880, 2
    %vm1882 = vcmp.gt.s32.totalorder 0, %v1881
    %v1883 = vsel %vm1882, 0, %v1881
    %v1884 = vsub.s32 32, %v1883
    %v1885 = vshll.u32 %v1876, %v1883
    %v1886 = vshrl.u32 %v1868, %v1884
    %v1887 = vor.u32 %v1885, %v1886
    %v1888 = vsub.s32 4294967266, %v1883
    %v1889 = vadd.s32 %v1888, 127
    %v1890 = vshll.u32 %v1889, 23
    %v1891 = vor.u32 4788187, %v1890
    %v1892 = vand.u32 2147483647, %v1891
    %v1894 = vcvt.s32.f32 %v1887
    %v1895 = vmul.f32 %v1894, %v1892
    %v1896 = vxor.u32 %v1895, 2147483648
    %v1897 = vsel %vm1776, %v1896, %v1895
    %v1898 = vsub.s32 4, %v1874
    %v1899 = vsel %vm1776, %v1898, %v1874
    %v1900 = vsel %vm1775, %v58, %v1897
    %v1901 = vsel %vm1775, 0, %v1899
    %v1902 = vmul.f32 %v1900, %v1900
    %v1903 = vmul.f32 %v1902, -0.001358992
    %v1904 = vadd.f32 %v1903, 0.041655596
    %v1905 = vmul.f32 %v1902, %v1904
    %v1906 = vadd.f32 %v1905, -0.4999988
    %v1907 = vmul.f32 %v1902, %v1906
    %v1908 = vadd.f32 1.0, %v1907
    %v1909 = vmul.f32 %v1900, %v1900
    %v1910 = vmul.f32 %v1909, -0.00019511016
    %v1911 = vadd.f32 %v1910, 0.008332121
    %v1912 = vmul.f32 %v1909, %v1911
    %v1913 = vadd.f32 %v1912, -0.16666654
    %v1914 = vmul.f32 %v1909, %v1913
    %v1915 = vadd.f32 %v1914, 1.0
    %v1916 = vmul.f32 %v1915, %v1900
    %vm1917 = vweird.f32 %v58
    %v1918 = vand.u32 %v1901, 3
    %vm1919 = vcmp.lt.s32.totalorder %v1918, 2
    %vm1920 = vcmp.eq.s32.totalorder %v1918, 0
    %v1921 = vxor.u32 %v1916, 2147483648
    %v1922 = vsel %vm1920, %v1908, %v1921
    %vm1923 = vcmp.eq.s32.totalorder %v1918, 2
    %v1924 = vxor.u32 %v1908, 2147483648
    %v1925 = vsel %vm1923, %v1924, %v1916
    %v1926 = vsel %vm1919, %v1922, %v1925
    %v1927 = vsel %vm1917, nan, %v1926
    %v1928 = vand.u32 2147483647, %v59
    %vm1929 = vcmp.le.f32.partialorder %v1928, 0.7853982
    %vm1930 = vcmp.lt.s32.totalorder %v59, 0
    %v1931 = vand.u32 %v59, 2139095040
    %v1932 = vshrl.u32 %v1931, 23
    %v1933 = vsub.s32 %v1932, 127
    %v1934 = vand.u32 2147483647, %v59
    %v1935 = vand.u32 %v1934, 8388607
    %v1936 = vor.u32 %v1935, 8388608
    %v1937 = vsub.s32 0, %v1936
    %v1938 = vadd.s32 %v1933, 1
    %vm1939 = vcmp.gt.s32.totalorder %v1938, 0
    %v1940 = vsel %vm1939, %v1938, 0
    %v1941 = vshrl.u32 %v1940, 5
    %v1942 = vand.u32 %v1940, 31
    %v1943 = vsub.s32 32, %v1942
    %v1944 = vshrl.u32 683565275, %v1943
    %v1945 = vshll.u32 683565275, %v1942
    %v1946 = vshrl.u32 2475754826, %v1943
    %v1947 = vor.u32 %v1945, %v1946
    %v1948 = vshll.u32 2475754826, %v1942
    %v1949 = vshrl.u32 2131351028, %v1943
    %v1950 = vor.u32 %v1948, %v1949
    %v1951 = vshll.u32 2131351028, %v1942
    %v1952 = vshrl.u32 2102212464, %v1943
    %v1953 = vor.u32 %v1951, %v1952
    %v1954 = vshll.u32 2102212464, %v1942
    %v1955 = vshrl.u32 920167782, %v1943
    %v1956 = vor.u32 %v1954, %v1955
    %v1957 = vshll.u32 920167782, %v1942
    %v1958 = vshrl.u32 1326507024, %v1943
    %v1959 = vor.u32 %v1957, %v1958
    %vm1960 = vcmp.lt.s32.totalorder %v1941, 1
    %vm1961 = vcmp.lt.s32.totalorder %v1941, 2
    %vm1962 = vcmp.lt.s32.totalorder %v1941, 3
    %vm1963 = vcmp.lt.s32.totalorder %v1941, 4
    %v1964 = vsel %vm1960, %v1944, %v1947
    %v1965 = vsel %vm1963, %v1953, 2102212464
    %v1966 = vsel %vm1962, %v1950, %v1965
    %v1967 = vsel %vm1961, %v1964, %v1966
    %v1968 = vsel %vm1960, %v1947, %v1950
    %v1969 = vsel %vm1963, %v1956, 920167782
    %v1970 = vsel %vm1962, %v1953, %v1969
    %v1971 = vsel %vm1961, %v1968, %v1970
    %v1972 = vsel %vm1960, %v1950, %v1953
    %v1973 = vsel %vm1963, %v1959, 1326507024
    %v1974 = vsel %vm1962, %v1956, %v1973
    %v1975 = vsel %vm1961, %v1972, %v1974
    %v1976 = vshll.u32 %v1936, 8
    %v1977 = vand.u32 %v1976, 65535
    %v1978 = vshrl.u32 %v1976, 16
    %v1979 = vand.u32 %v1975, 65535
    %v1980 = vshrl.u32 %v1975, 16
    %v1981 = vmul.u32 %v1977, %v1979
    %v1982 = vmul.u32 %v1977, %v1980
    %v1983 = vmul.u32 %v1978, %v1979
    %v1984 = vmul.u32 %v1978, %v1980
    %v1985 = vshll.u32 %v1982, 16
    %v1986 = vshrl.u32 %v1982, 16
    %v1987 = vshll.u32 %v1983, 16
    %v1988 = vshrl.u32 %v1983, 16
    %vm1989 = vc.u32 %v1981, %v1985
    %v1990 = vsel %vm1989, 1, 0
    %v1991 = vadd.s32 %v1981, %v1985
    %v1992 = vadd.s32 %v1984, %v1990
    %vm1993 = vc.u32 %v1991, %v1987
    %v1994 = vsel %vm1993, 1, 0
    %v1995 = vadd.s32 %v1991, %v1987
    %v1996 = vadd.s32 %v1992, %v1994
    %v1997 = vadd.s32 %v1996, %v1986
    %v1998 = vadd.s32 %v1997, %v1988
    %v1999 = vand.u32 %v1976, 65535
    %v2000 = vshrl.u32 %v1976, 16
    %v2001 = vand.u32 %v1971, 65535
    %v2002 = vshrl.u32 %v1971, 16
    %v2003 = vmul.u32 %v1999, %v2001
    %v2004 = vmul.u32 %v1999, %v2002
    %v2005 = vmul.u32 %v2000, %v2001
    %v2006 = vmul.u32 %v2000, %v2002
    %v2007 = vshll.u32 %v2004, 16
    %v2008 = vshrl.u32 %v2004, 16
    %v2009 = vshll.u32 %v2005, 16
    %v2010 = vshrl.u32 %v2005, 16
    %vm2011 = vc.u32 %v2003, %v2007
    %v2012 = vsel %vm2011, 1, 0
    %v2013 = vadd.s32 %v2003, %v2007
    %v2014 = vadd.s32 %v2006, %v2012
    %vm2015 = vc.u32 %v2013, %v2009
    %v2016 = vsel %vm2015, 1, 0
    %v2017 = vadd.s32 %v2013, %v2009
    %v2018 = vadd.s32 %v2014, %v2016
    %v2019 = vadd.s32 %v2018, %v2008
    %v2020 = vadd.s32 %v2019, %v2010
    %v2021 = vmul.u32 %v1976, %v1967
    %v2022 = vadd.s32 %v1998, %v2017
    %vm2023 = vc.u32 %v1998, %v2017
    %v2024 = vadd.s32 %v2020, 1
    %v2025 = vsel %vm2023, %v2024, %v2020
    %v2026 = vadd.s32 %v2021, %v2025
    %v2027 = vadd.s32 %v2026, 536870912
    %v2028 = vshrl.u32 %v2027, 30
    %v2029 = vshll.u32 %v2028, 30
    %v2030 = vsub.s32 %v2026, %v2029
    %vm2031 = vcmp.lt.s32.totalorder %v2030, 0
    %v2032 = vsub.s32 0, %v2030
    %v2033 = vsel %vm2031, %v2032, %v2030
    %v2034 = vclz %v2033
    %v2035 = vsub.s32 %v2034, 2
    %vm2036 = vcmp.gt.s32.totalorder 0, %v2035
    %v2037 = vsel %vm2036, 0, %v2035
    %v2038 = vsub.s32 32, %v2037
    %v2039 = vshll.u32 %v2030, %v2037
    %v2040 = vshrl.u32 %v2022, %v2038
    %v2041 = vor.u32 %v2039, %v2040
    %v2042 = vsub.s32 4294967266, %v2037
    %v2043 = vadd.s32 %v2042, 127
    %v2044 = vshll.u32 %v2043, 23
    %v2045 = vor.u32 4788187, %v2044
    %v2046 = vand.u32 2147483647, %v2045
    %v2048 = vcvt.s32.f32 %v2041
    %v2049 = vmul.f32 %v2048, %v2046
    %v2050 = vxor.u32 %v2049, 2147483648
    %v2051 = vsel %vm1930, %v2050, %v2049
    %v2052 = vsub.s32 4, %v2028
    %v2053 = vsel %vm1930, %v2052, %v2028
    %v2054 = vsel %vm1929, %v59, %v2051
    %v2055 = vsel %vm1929, 0, %v2053
    %v2056 = vmul.f32 %v2054, %v2054
    %v2057 = vmul.f32 %v2056, -0.001358992
    %v2058 = vadd.f32 %v2057, 0.041655596
    %v2059 = vmul.f32 %v2056, %v2058
    %v2060 = vadd.f32 %v2059, -0.4999988
    %v2061 = vmul.f32 %v2056, %v2060
    %v2062 = vadd.f32 1.0, %v2061
    %v2063 = vmul.f32 %v2054, %v2054
    %v2064 = vmul.f32 %v2063, -0.00019511016
    %v2065 = vadd.f32 %v2064, 0.008332121
    %v2066 = vmul.f32 %v2063, %v2065
    %v2067 = vadd.f32 %v2066, -0.16666654
    %v2068 = vmul.f32 %v2063, %v2067
    %v2069 = vadd.f32 %v2068, 1.0
    %v2070 = vmul.f32 %v2069, %v2054
    %vm2071 = vweird.f32 %v59
    %v2072 = vand.u32 %v2055, 3
    %vm2073 = vcmp.lt.s32.totalorder %v2072, 2
    %vm2074 = vcmp.eq.s32.totalorder %v2072, 0
    %v2075 = vxor.u32 %v2070, 2147483648
    %v2076 = vsel %vm2074, %v2062, %v2075
    %vm2077 = vcmp.eq.s32.totalorder %v2072, 2
    %v2078 = vxor.u32 %v2062, 2147483648
    %v2079 = vsel %vm2077, %v2078, %v2070
    %v2080 = vsel %vm2073, %v2076, %v2079
    %v2081 = vsel %vm2071, nan, %v2080
    %v2082 = vand.u32 2147483647, %v60
    %vm2083 = vcmp.le.f32.partialorder %v2082, 0.7853982
    %vm2084 = vcmp.lt.s32.totalorder %v60, 0
    %v2085 = vand.u32 %v60, 2139095040
    %v2086 = vshrl.u32 %v2085, 23
    %v2087 = vsub.s32 %v2086, 127
    %v2088 = vand.u32 2147483647, %v60
    %v2089 = vand.u32 %v2088, 8388607
    %v2090 = vor.u32 %v2089, 8388608
    %v2091 = vsub.s32 0, %v2090
    %v2092 = vadd.s32 %v2087, 1
    %vm2093 = vcmp.gt.s32.totalorder %v2092, 0
    %v2094 = vsel %vm2093, %v2092, 0
    %v2095 = vshrl.u32 %v2094, 5
    %v2096 = vand.u32 %v2094, 31
    %v2097 = vsub.s32 32, %v2096
    %v2098 = vshrl.u32 683565275, %v2097
    %v2099 = vshll.u32 683565275, %v2096
    %v2100 = vshrl.u32 2475754826, %v2097
    %v2101 = vor.u32 %v2099, %v2100
    %v2102 = vshll.u32 2475754826, %v2096
    %v2103 = vshrl.u32 2131351028, %v2097
    %v2104 = vor.u32 %v2102, %v2103
    %v2105 = vshll.u32 2131351028, %v2096
    %v2106 = vshrl.u32 2102212464, %v2097
    %v2107 = vor.u32 %v2105, %v2106
    %v2108 = vshll.u32 2102212464, %v2096
    %v2109 = vshrl.u32 920167782, %v2097
    %v2110 = vor.u32 %v2108, %v2109
    %v2111 = vshll.u32 920167782, %v2096
    %v2112 = vshrl.u32 1326507024, %v2097
    %v2113 = vor.u32 %v2111, %v2112
    %vm2114 = vcmp.lt.s32.totalorder %v2095, 1
    %vm2115 = vcmp.lt.s32.totalorder %v2095, 2
    %vm2116 = vcmp.lt.s32.totalorder %v2095, 3
    %vm2117 = vcmp.lt.s32.totalorder %v2095, 4
    %v2118 = vsel %vm2114, %v2098, %v2101
    %v2119 = vsel %vm2117, %v2107, 2102212464
    %v2120 = vsel %vm2116, %v2104, %v2119
    %v2121 = vsel %vm2115, %v2118, %v2120
    %v2122 = vsel %vm2114, %v2101, %v2104
    %v2123 = vsel %vm2117, %v2110, 920167782
    %v2124 = vsel %vm2116, %v2107, %v2123
    %v2125 = vsel %vm2115, %v2122, %v2124
    %v2126 = vsel %vm2114, %v2104, %v2107
    %v2127 = vsel %vm2117, %v2113, 1326507024
    %v2128 = vsel %vm2116, %v2110, %v2127
    %v2129 = vsel %vm2115, %v2126, %v2128
    %v2130 = vshll.u32 %v2090, 8
    %v2131 = vand.u32 %v2130, 65535
    %v2132 = vshrl.u32 %v2130, 16
    %v2133 = vand.u32 %v2129, 65535
    %v2134 = vshrl.u32 %v2129, 16
    %v2135 = vmul.u32 %v2131, %v2133
    %v2136 = vmul.u32 %v2131, %v2134
    %v2137 = vmul.u32 %v2132, %v2133
    %v2138 = vmul.u32 %v2132, %v2134
    %v2139 = vshll.u32 %v2136, 16
    %v2140 = vshrl.u32 %v2136, 16
    %v2141 = vshll.u32 %v2137, 16
    %v2142 = vshrl.u32 %v2137, 16
    %vm2143 = vc.u32 %v2135, %v2139
    %v2144 = vsel %vm2143, 1, 0
    %v2145 = vadd.s32 %v2135, %v2139
    %v2146 = vadd.s32 %v2138, %v2144
    %vm2147 = vc.u32 %v2145, %v2141
    %v2148 = vsel %vm2147, 1, 0
    %v2149 = vadd.s32 %v2145, %v2141
    %v2150 = vadd.s32 %v2146, %v2148
    %v2151 = vadd.s32 %v2150, %v2140
    %v2152 = vadd.s32 %v2151, %v2142
    %v2153 = vand.u32 %v2130, 65535
    %v2154 = vshrl.u32 %v2130, 16
    %v2155 = vand.u32 %v2125, 65535
    %v2156 = vshrl.u32 %v2125, 16
    %v2157 = vmul.u32 %v2153, %v2155
    %v2158 = vmul.u32 %v2153, %v2156
    %v2159 = vmul.u32 %v2154, %v2155
    %v2160 = vmul.u32 %v2154, %v2156
    %v2161 = vshll.u32 %v2158, 16
    %v2162 = vshrl.u32 %v2158, 16
    %v2163 = vshll.u32 %v2159, 16
    %v2164 = vshrl.u32 %v2159, 16
    %vm2165 = vc.u32 %v2157, %v2161
    %v2166 = vsel %vm2165, 1, 0
    %v2167 = vadd.s32 %v2157, %v2161
    %v2168 = vadd.s32 %v2160, %v2166
    %vm2169 = vc.u32 %v2167, %v2163
    %v2170 = vsel %vm2169, 1, 0
    %v2171 = vadd.s32 %v2167, %v2163
    %v2172 = vadd.s32 %v2168, %v2170
    %v2173 = vadd.s32 %v2172, %v2162
    %v2174 = vadd.s32 %v2173, %v2164
    %v2175 = vmul.u32 %v2130, %v2121
    %v2176 = vadd.s32 %v2152, %v2171
    %vm2177 = vc.u32 %v2152, %v2171
    %v2178 = vadd.s32 %v2174, 1
    %v2179 = vsel %vm2177, %v2178, %v2174
    %v2180 = vadd.s32 %v2175, %v2179
    %v2181 = vadd.s32 %v2180, 536870912
    %v2182 = vshrl.u32 %v2181, 30
    %v2183 = vshll.u32 %v2182, 30
    %v2184 = vsub.s32 %v2180, %v2183
    %vm2185 = vcmp.lt.s32.totalorder %v2184, 0
    %v2186 = vsub.s32 0, %v2184
    %v2187 = vsel %vm2185, %v2186, %v2184
    %v2188 = vclz %v2187
    %v2189 = vsub.s32 %v2188, 2
    %vm2190 = vcmp.gt.s32.totalorder 0, %v2189
    %v2191 = vsel %vm2190, 0, %v2189
    %v2192 = vsub.s32 32, %v2191
    %v2193 = vshll.u32 %v2184, %v2191
    %v2194 = vshrl.u32 %v2176, %v2192
    %v2195 = vor.u32 %v2193, %v2194
    %v2196 = vsub.s32 4294967266, %v2191
    %v2197 = vadd.s32 %v2196, 127
    %v2198 = vshll.u32 %v2197, 23
    %v2199 = vor.u32 4788187, %v2198
    %v2200 = vand.u32 2147483647, %v2199
    %v2202 = vcvt.s32.f32 %v2195
    %v2203 = vmul.f32 %v2202, %v2200
    %v2204 = vxor.u32 %v2203, 2147483648
    %v2205 = vsel %vm2084, %v2204, %v2203
    %v2206 = vsub.s32 4, %v2182
    %v2207 = vsel %vm2084, %v2206, %v2182
    %v2208 = vsel %vm2083, %v60, %v2205
    %v2209 = vsel %vm2083, 0, %v2207
    %v2210 = vmul.f32 %v2208, %v2208
    %v2211 = vmul.f32 %v2210, -0.001358992
    %v2212 = vadd.f32 %v2211, 0.041655596
    %v2213 = vmul.f32 %v2210, %v2212
    %v2214 = vadd.f32 %v2213, -0.4999988
    %v2215 = vmul.f32 %v2210, %v2214
    %v2216 = vadd.f32 1.0, %v2215
    %v2217 = vmul.f32 %v2208, %v2208
    %v2218 = vmul.f32 %v2217, -0.00019511016
    %v2219 = vadd.f32 %v2218, 0.008332121
    %v2220 = vmul.f32 %v2217, %v2219
    %v2221 = vadd.f32 %v2220, -0.16666654
    %v2222 = vmul.f32 %v2217, %v2221
    %v2223 = vadd.f32 %v2222, 1.0
    %v2224 = vmul.f32 %v2223, %v2208
    %vm2225 = vweird.f32 %v60
    %v2226 = vand.u32 %v2209, 3
    %vm2227 = vcmp.lt.s32.totalorder %v2226, 2
    %vm2228 = vcmp.eq.s32.totalorder %v2226, 0
    %v2229 = vxor.u32 %v2224, 2147483648
    %v2230 = vsel %vm2228, %v2216, %v2229
    %vm2231 = vcmp.eq.s32.totalorder %v2226, 2
    %v2232 = vxor.u32 %v2216, 2147483648
    %v2233 = vsel %vm2231, %v2232, %v2224
    %v2234 = vsel %vm2227, %v2230, %v2233
    %v2235 = vsel %vm2225, nan, %v2234
    %v2236 = vand.u32 2147483647, %v61
    %vm2237 = vcmp.le.f32.partialorder %v2236, 0.7853982
    %vm2238 = vcmp.lt.s32.totalorder %v61, 0
    %v2239 = vand.u32 %v61, 2139095040
    %v2240 = vshrl.u32 %v2239, 23
    %v2241 = vsub.s32 %v2240, 127
    %v2242 = vand.u32 2147483647, %v61
    %v2243 = vand.u32 %v2242, 8388607
    %v2244 = vor.u32 %v2243, 8388608
    %v2245 = vsub.s32 0, %v2244
    %v2246 = vadd.s32 %v2241, 1
    %vm2247 = vcmp.gt.s32.totalorder %v2246, 0
    %v2248 = vsel %vm2247, %v2246, 0
    %v2249 = vshrl.u32 %v2248, 5
    %v2250 = vand.u32 %v2248, 31
    %v2251 = vsub.s32 32, %v2250
    %v2252 = vshrl.u32 683565275, %v2251
    %v2253 = vshll.u32 683565275, %v2250
    %v2254 = vshrl.u32 2475754826, %v2251
    %v2255 = vor.u32 %v2253, %v2254
    %v2256 = vshll.u32 2475754826, %v2250
    %v2257 = vshrl.u32 2131351028, %v2251
    %v2258 = vor.u32 %v2256, %v2257
    %v2259 = vshll.u32 2131351028, %v2250
    %v2260 = vshrl.u32 2102212464, %v2251
    %v2261 = vor.u32 %v2259, %v2260
    %v2262 = vshll.u32 2102212464, %v2250
    %v2263 = vshrl.u32 920167782, %v2251
    %v2264 = vor.u32 %v2262, %v2263
    %v2265 = vshll.u32 920167782, %v2250
    %v2266 = vshrl.u32 1326507024, %v2251
    %v2267 = vor.u32 %v2265, %v2266
    %vm2268 = vcmp.lt.s32.totalorder %v2249, 1
    %vm2269 = vcmp.lt.s32.totalorder %v2249, 2
    %vm2270 = vcmp.lt.s32.totalorder %v2249, 3
    %vm2271 = vcmp.lt.s32.totalorder %v2249, 4
    %v2272 = vsel %vm2268, %v2252, %v2255
    %v2273 = vsel %vm2271, %v2261, 2102212464
    %v2274 = vsel %vm2270, %v2258, %v2273
    %v2275 = vsel %vm2269, %v2272, %v2274
    %v2276 = vsel %vm2268, %v2255, %v2258
    %v2277 = vsel %vm2271, %v2264, 920167782
    %v2278 = vsel %vm2270, %v2261, %v2277
    %v2279 = vsel %vm2269, %v2276, %v2278
    %v2280 = vsel %vm2268, %v2258, %v2261
    %v2281 = vsel %vm2271, %v2267, 1326507024
    %v2282 = vsel %vm2270, %v2264, %v2281
    %v2283 = vsel %vm2269, %v2280, %v2282
    %v2284 = vshll.u32 %v2244, 8
    %v2285 = vand.u32 %v2284, 65535
    %v2286 = vshrl.u32 %v2284, 16
    %v2287 = vand.u32 %v2283, 65535
    %v2288 = vshrl.u32 %v2283, 16
    %v2289 = vmul.u32 %v2285, %v2287
    %v2290 = vmul.u32 %v2285, %v2288
    %v2291 = vmul.u32 %v2286, %v2287
    %v2292 = vmul.u32 %v2286, %v2288
    %v2293 = vshll.u32 %v2290, 16
    %v2294 = vshrl.u32 %v2290, 16
    %v2295 = vshll.u32 %v2291, 16
    %v2296 = vshrl.u32 %v2291, 16
    %vm2297 = vc.u32 %v2289, %v2293
    %v2298 = vsel %vm2297, 1, 0
    %v2299 = vadd.s32 %v2289, %v2293
    %v2300 = vadd.s32 %v2292, %v2298
    %vm2301 = vc.u32 %v2299, %v2295
    %v2302 = vsel %vm2301, 1, 0
    %v2303 = vadd.s32 %v2299, %v2295
    %v2304 = vadd.s32 %v2300, %v2302
    %v2305 = vadd.s32 %v2304, %v2294
    %v2306 = vadd.s32 %v2305, %v2296
    %v2307 = vand.u32 %v2284, 65535
    %v2308 = vshrl.u32 %v2284, 16
    %v2309 = vand.u32 %v2279, 65535
    %v2310 = vshrl.u32 %v2279, 16
    %v2311 = vmul.u32 %v2307, %v2309
    %v2312 = vmul.u32 %v2307, %v2310
    %v2313 = vmul.u32 %v2308, %v2309
    %v2314 = vmul.u32 %v2308, %v2310
    %v2315 = vshll.u32 %v2312, 16
    %v2316 = vshrl.u32 %v2312, 16
    %v2317 = vshll.u32 %v2313, 16
    %v2318 = vshrl.u32 %v2313, 16
    %vm2319 = vc.u32 %v2311, %v2315
    %v2320 = vsel %vm2319, 1, 0
    %v2321 = vadd.s32 %v2311, %v2315
    %v2322 = vadd.s32 %v2314, %v2320
    %vm2323 = vc.u32 %v2321, %v2317
    %v2324 = vsel %vm2323, 1, 0
    %v2325 = vadd.s32 %v2321, %v2317
    %v2326 = vadd.s32 %v2322, %v2324
    %v2327 = vadd.s32 %v2326, %v2316
    %v2328 = vadd.s32 %v2327, %v2318
    %v2329 = vmul.u32 %v2284, %v2275
    %v2330 = vadd.s32 %v2306, %v2325
    %vm2331 = vc.u32 %v2306, %v2325
    %v2332 = vadd.s32 %v2328, 1
    %v2333 = vsel %vm2331, %v2332, %v2328
    %v2334 = vadd.s32 %v2329, %v2333
    %v2335 = vadd.s32 %v2334, 536870912
    %v2336 = vshrl.u32 %v2335, 30
    %v2337 = vshll.u32 %v2336, 30
    %v2338 = vsub.s32 %v2334, %v2337
    %vm2339 = vcmp.lt.s32.totalorder %v2338, 0
    %v2340 = vsub.s32 0, %v2338
    %v2341 = vsel %vm2339, %v2340, %v2338
    %v2342 = vclz %v2341
    %v2343 = vsub.s32 %v2342, 2
    %vm2344 = vcmp.gt.s32.totalorder 0, %v2343
    %v2345 = vsel %vm2344, 0, %v2343
    %v2346 = vsub.s32 32, %v2345
    %v2347 = vshll.u32 %v2338, %v2345
    %v2348 = vshrl.u32 %v2330, %v2346
    %v2349 = vor.u32 %v2347, %v2348
    %v2350 = vsub.s32 4294967266, %v2345
    %v2351 = vadd.s32 %v2350, 127
    %v2352 = vshll.u32 %v2351, 23
    %v2353 = vor.u32 4788187, %v2352
    %v2354 = vand.u32 2147483647, %v2353
    %v2356 = vcvt.s32.f32 %v2349
    %v2357 = vmul.f32 %v2356, %v2354
    %v2358 = vxor.u32 %v2357, 2147483648
    %v2359 = vsel %vm2238, %v2358, %v2357
    %v2360 = vsub.s32 4, %v2336
    %v2361 = vsel %vm2238, %v2360, %v2336
    %v2362 = vsel %vm2237, %v61, %v2359
    %v2363 = vsel %vm2237, 0, %v2361
    %v2364 = vmul.f32 %v2362, %v2362
    %v2365 = vmul.f32 %v2364, -0.001358992
    %v2366 = vadd.f32 %v2365, 0.041655596
    %v2367 = vmul.f32 %v2364, %v2366
    %v2368 = vadd.f32 %v2367, -0.4999988
    %v2369 = vmul.f32 %v2364, %v2368
    %v2370 = vadd.f32 1.0, %v2369
    %v2371 = vmul.f32 %v2362, %v2362
    %v2372 = vmul.f32 %v2371, -0.00019511016
    %v2373 = vadd.f32 %v2372, 0.008332121
    %v2374 = vmul.f32 %v2371, %v2373
    %v2375 = vadd.f32 %v2374, -0.16666654
    %v2376 = vmul.f32 %v2371, %v2375
    %v2377 = vadd.f32 %v2376, 1.0
    %v2378 = vmul.f32 %v2377, %v2362
    %vm2379 = vweird.f32 %v61
    %v2380 = vand.u32 %v2363, 3
    %vm2381 = vcmp.lt.s32.totalorder %v2380, 2
    %vm2382 = vcmp.eq.s32.totalorder %v2380, 0
    %v2383 = vxor.u32 %v2378, 2147483648
    %v2384 = vsel %vm2382, %v2370, %v2383
    %vm2385 = vcmp.eq.s32.totalorder %v2380, 2
    %v2386 = vxor.u32 %v2370, 2147483648
    %v2387 = vsel %vm2385, %v2386, %v2378
    %v2388 = vsel %vm2381, %v2384, %v2387
    %v2389 = vsel %vm2379, nan, %v2388
    %v2390 = vand.u32 2147483647, %v62
    %vm2391 = vcmp.le.f32.partialorder %v2390, 0.7853982
    %vm2392 = vcmp.lt.s32.totalorder %v62, 0
    %v2393 = vand.u32 %v62, 2139095040
    %v2394 = vshrl.u32 %v2393, 23
    %v2395 = vsub.s32 %v2394, 127
    %v2396 = vand.u32 2147483647, %v62
    %v2397 = vand.u32 %v2396, 8388607
    %v2398 = vor.u32 %v2397, 8388608
    %v2399 = vsub.s32 0, %v2398
    %v2400 = vadd.s32 %v2395, 1
    %vm2401 = vcmp.gt.s32.totalorder %v2400, 0
    %v2402 = vsel %vm2401, %v2400, 0
    %v2403 = vshrl.u32 %v2402, 5
    %v2404 = vand.u32 %v2402, 31
    %v2405 = vsub.s32 32, %v2404
    %v2406 = vshrl.u32 683565275, %v2405
    %v2407 = vshll.u32 683565275, %v2404
    %v2408 = vshrl.u32 2475754826, %v2405
    %v2409 = vor.u32 %v2407, %v2408
    %v2410 = vshll.u32 2475754826, %v2404
    %v2411 = vshrl.u32 2131351028, %v2405
    %v2412 = vor.u32 %v2410, %v2411
    %v2413 = vshll.u32 2131351028, %v2404
    %v2414 = vshrl.u32 2102212464, %v2405
    %v2415 = vor.u32 %v2413, %v2414
    %v2416 = vshll.u32 2102212464, %v2404
    %v2417 = vshrl.u32 920167782, %v2405
    %v2418 = vor.u32 %v2416, %v2417
    %v2419 = vshll.u32 920167782, %v2404
    %v2420 = vshrl.u32 1326507024, %v2405
    %v2421 = vor.u32 %v2419, %v2420
    %vm2422 = vcmp.lt.s32.totalorder %v2403, 1
    %vm2423 = vcmp.lt.s32.totalorder %v2403, 2
    %vm2424 = vcmp.lt.s32.totalorder %v2403, 3
    %vm2425 = vcmp.lt.s32.totalorder %v2403, 4
    %v2426 = vsel %vm2422, %v2406, %v2409
    %v2427 = vsel %vm2425, %v2415, 2102212464
    %v2428 = vsel %vm2424, %v2412, %v2427
    %v2429 = vsel %vm2423, %v2426, %v2428
    %v2430 = vsel %vm2422, %v2409, %v2412
    %v2431 = vsel %vm2425, %v2418, 920167782
    %v2432 = vsel %vm2424, %v2415, %v2431
    %v2433 = vsel %vm2423, %v2430, %v2432
    %v2434 = vsel %vm2422, %v2412, %v2415
    %v2435 = vsel %vm2425, %v2421, 1326507024
    %v2436 = vsel %vm2424, %v2418, %v2435
    %v2437 = vsel %vm2423, %v2434, %v2436
    %v2438 = vshll.u32 %v2398, 8
    %v2439 = vand.u32 %v2438, 65535
    %v2440 = vshrl.u32 %v2438, 16
    %v2441 = vand.u32 %v2437, 65535
    %v2442 = vshrl.u32 %v2437, 16
    %v2443 = vmul.u32 %v2439, %v2441
    %v2444 = vmul.u32 %v2439, %v2442
    %v2445 = vmul.u32 %v2440, %v2441
    %v2446 = vmul.u32 %v2440, %v2442
    %v2447 = vshll.u32 %v2444, 16
    %v2448 = vshrl.u32 %v2444, 16
    %v2449 = vshll.u32 %v2445, 16
    %v2450 = vshrl.u32 %v2445, 16
    %vm2451 = vc.u32 %v2443, %v2447
    %v2452 = vsel %vm2451, 1, 0
    %v2453 = vadd.s32 %v2443, %v2447
    %v2454 = vadd.s32 %v2446, %v2452
    %vm2455 = vc.u32 %v2453, %v2449
    %v2456 = vsel %vm2455, 1, 0
    %v2457 = vadd.s32 %v2453, %v2449
    %v2458 = vadd.s32 %v2454, %v2456
    %v2459 = vadd.s32 %v2458, %v2448
    %v2460 = vadd.s32 %v2459, %v2450
    %v2461 = vand.u32 %v2438, 65535
    %v2462 = vshrl.u32 %v2438, 16
    %v2463 = vand.u32 %v2433, 65535
    %v2464 = vshrl.u32 %v2433, 16
    %v2465 = vmul.u32 %v2461, %v2463
    %v2466 = vmul.u32 %v2461, %v2464
    %v2467 = vmul.u32 %v2462, %v2463
    %v2468 = vmul.u32 %v2462, %v2464
    %v2469 = vshll.u32 %v2466, 16
    %v2470 = vshrl.u32 %v2466, 16
    %v2471 = vshll.u32 %v2467, 16
    %v2472 = vshrl.u32 %v2467, 16
    %vm2473 = vc.u32 %v2465, %v2469
    %v2474 = vsel %vm2473, 1, 0
    %v2475 = vadd.s32 %v2465, %v2469
    %v2476 = vadd.s32 %v2468, %v2474
    %vm2477 = vc.u32 %v2475, %v2471
    %v2478 = vsel %vm2477, 1, 0
    %v2479 = vadd.s32 %v2475, %v2471
    %v2480 = vadd.s32 %v2476, %v2478
    %v2481 = vadd.s32 %v2480, %v2470
    %v2482 = vadd.s32 %v2481, %v2472
    %v2483 = vmul.u32 %v2438, %v2429
    %v2484 = vadd.s32 %v2460, %v2479
    %vm2485 = vc.u32 %v2460, %v2479
    %v2486 = vadd.s32 %v2482, 1
    %v2487 = vsel %vm2485, %v2486, %v2482
    %v2488 = vadd.s32 %v2483, %v2487
    %v2489 = vadd.s32 %v2488, 536870912
    %v2490 = vshrl.u32 %v2489, 30
    %v2491 = vshll.u32 %v2490, 30
    %v2492 = vsub.s32 %v2488, %v2491
    %vm2493 = vcmp.lt.s32.totalorder %v2492, 0
    %v2494 = vsub.s32 0, %v2492
    %v2495 = vsel %vm2493, %v2494, %v2492
    %v2496 = vclz %v2495
    %v2497 = vsub.s32 %v2496, 2
    %vm2498 = vcmp.gt.s32.totalorder 0, %v2497
    %v2499 = vsel %vm2498, 0, %v2497
    %v2500 = vsub.s32 32, %v2499
    %v2501 = vshll.u32 %v2492, %v2499
    %v2502 = vshrl.u32 %v2484, %v2500
    %v2503 = vor.u32 %v2501, %v2502
    %v2504 = vsub.s32 4294967266, %v2499
    %v2505 = vadd.s32 %v2504, 127
    %v2506 = vshll.u32 %v2505, 23
    %v2507 = vor.u32 4788187, %v2506
    %v2508 = vand.u32 2147483647, %v2507
    %v2510 = vcvt.s32.f32 %v2503
    %v2511 = vmul.f32 %v2510, %v2508
    %v2512 = vxor.u32 %v2511, 2147483648
    %v2513 = vsel %vm2392, %v2512, %v2511
    %v2514 = vsub.s32 4, %v2490
    %v2515 = vsel %vm2392, %v2514, %v2490
    %v2516 = vsel %vm2391, %v62, %v2513
    %v2517 = vsel %vm2391, 0, %v2515
    %v2518 = vmul.f32 %v2516, %v2516
    %v2519 = vmul.f32 %v2518, -0.001358992
    %v2520 = vadd.f32 %v2519, 0.041655596
    %v2521 = vmul.f32 %v2518, %v2520
    %v2522 = vadd.f32 %v2521, -0.4999988
    %v2523 = vmul.f32 %v2518, %v2522
    %v2524 = vadd.f32 1.0, %v2523
    %v2525 = vmul.f32 %v2516, %v2516
    %v2526 = vmul.f32 %v2525, -0.00019511016
    %v2527 = vadd.f32 %v2526, 0.008332121
    %v2528 = vmul.f32 %v2525, %v2527
    %v2529 = vadd.f32 %v2528, -0.16666654
    %v2530 = vmul.f32 %v2525, %v2529
    %v2531 = vadd.f32 %v2530, 1.0
    %v2532 = vmul.f32 %v2531, %v2516
    %vm2533 = vweird.f32 %v62
    %v2534 = vand.u32 %v2517, 3
    %vm2535 = vcmp.lt.s32.totalorder %v2534, 2
    %vm2536 = vcmp.eq.s32.totalorder %v2534, 0
    %v2537 = vxor.u32 %v2532, 2147483648
    %v2538 = vsel %vm2536, %v2524, %v2537
    %vm2539 = vcmp.eq.s32.totalorder %v2534, 2
    %v2540 = vxor.u32 %v2524, 2147483648
    %v2541 = vsel %vm2539, %v2540, %v2532
    %v2542 = vsel %vm2535, %v2538, %v2541
    %v2543 = vsel %vm2533, nan, %v2542
    %2544 = vst.msk [vmem:[%s2] sm:$0xff] %vm1303, %v1465
    %2545 = vst.msk [vmem:[%s2 + $0x8] sm:$0xff] %vm1303, %v1619
    %2546 = vst.msk [vmem:[%s2 + $0x10] sm:$0xff] %vm1303, %v1773
    %2547 = vst.msk [vmem:[%s2 + $0x18] sm:$0xff] %vm1303, %v1927
    %2548 = vst.msk [vmem:[%s2 + $0x20] sm:$0xff] %vm1303, %v2081
    %2549 = vst.msk [vmem:[%s2 + $0x28] sm:$0xff] %vm1303, %v2235
    %2550 = vst.msk [vmem:[%s2 + $0x30] sm:$0xff] %vm1303, %v2389
    %2551 = vst.msk [vmem:[%s2 + $0x38] sm:$0xff] %vm1303, %v2543
    // Predicated region
    $region10: #{tpu_custom_call.1} parent=1 // pred_check
      _
    $region11: #{tpu_custom_call.1} parent=1 // pred_check_branch
      %2553 = sbr.rel (0) target = $region13
    $region12: #{tpu_custom_call.1} parent=1 // pred_region
      _
    $region13: #{tpu_custom_call.1} parent=1 // pred_fallthru
      _
    // Predicated region
    $region14: #{tpu_custom_call.1} parent=1 // pred_check
      _
    $region15: #{tpu_custom_call.1} parent=1 // pred_check_branch
      %2555 = sbr.rel (0) target = $region17
    $region16: #{tpu_custom_call.1} parent=1 // pred_region
      _
    $region17: #{tpu_custom_call.1} parent=1 // pred_fallthru
      _
    // Predicated region
    $region18: #{tpu_custom_call.1} parent=1 // pred_check
      _
    $region19: #{tpu_custom_call.1} parent=1 // pred_check_branch
      %2557 = sbr.rel (0) target = $region21
    $region20: #{tpu_custom_call.1} parent=1 // pred_region
      _
    $region21: #{tpu_custom_call.1} parent=1 // pred_fallthru
      _
    // Predicated region
    $region22: #{tpu_custom_call.1} parent=1 // pred_check
      _
    $region23: #{tpu_custom_call.1} parent=1 // pred_check_branch
      %2559 = sbr.rel (0) target = $region25
    $region24: #{tpu_custom_call.1} parent=1 // pred_region
      _
    $region25: #{tpu_custom_call.1} parent=1 // pred_fallthru
      _
    %2560 = vsyncpa [#allocation3], 1

</llo_original>
